<compile_context>
chip_gen: v7x
topology: tpu7x:2x2x1
jax: 0.10.0
libtpu: 0.0.40
codegen_flags: <defaults>
</compile_context>

<pallas_src>
import jax
import jax.numpy as jnp
from jax import lax
from jax.experimental import pallas as pl
from jax.experimental.pallas import tpu as pltpu

# ----------------------- config (mirrors LSTMTagger.__init__) -----------------
VOCAB = 50           # data.word_alphabet.size()
EMB_DIM = 32         # data.word_emb_dim
HIDDEN = 32          # data.HP_hidden_dim
LABELS = 6           # data.label_alphabet.size()
TAGSET = LABELS + 2  # hidden2tag output dim (label size + 2)
SEQ = 8
START = TAGSET - 2
STOP = TAGSET - 1
NEG = -10000.0


# ----------------------------- fused Pallas kernel -----------------------------
def lstm_tagger_crf_kernel(words_ref, emb_ref, wih_ref, whh_ref, bcat_ref,
                           wtagf_ref, wtagb_ref, btag_ref, trans_ref,
                           score_ref, tags_ref,
                           embeds_sc, h_fwd_sc, h_bwd_sc):
    S, _ = embeds_sc.shape
    H = h_fwd_sc.shape[1]
    G = 4 * H                 # per-direction gate width
    T = trans_ref.shape[0]
    start, stop = T - 2, T - 1

    # ---- embedding gather: word ids in SMEM, table VMEM-resident ------------
    for t in range(S):
        embeds_sc[t:t + 1, :] = emb_ref[pl.ds(words_ref[t], 1), :]

    # ---- input projection for BOTH directions: one (S,E)@(E,8H) matmul ------
    gates_in = (jnp.dot(embeds_sc[...].astype(jnp.bfloat16), wih_ref[...],
                        preferred_element_type=jnp.float32)
                + bcat_ref[...])                                   # (S, 8H) f32

    # ---- fused fwd+bwd recurrence: one (2,H)@(H,8H) matmul per step ----------
    whh = whh_ref[...]                                             # (H, 8H) bf16
    row0 = lax.broadcasted_iota(jnp.int32, (2, G), 0) == 0         # hoisted
    h = jnp.zeros((2, H), jnp.float32)                             # [h_fwd; h_bwd]
    c = jnp.zeros((2, H), jnp.float32)
    for t in range(S):                                             # fully unrolled
        rev = S - 1 - t
        gf = gates_in[t:t + 1, 0:G]                                # fwd gates (pos t)
        gb = gates_in[rev:rev + 1, G:2 * G]                        # bwd gates (pos rev)
        if t > 0:                                                  # h == 0 at t == 0
            rec = jnp.dot(h.astype(jnp.bfloat16), whh,
                          preferred_element_type=jnp.float32)      # (2, 8H)
            gf = gf + rec[0:1, 0:G]
            gb = gb + rec[1:2, G:2 * G]
        g2 = jnp.where(row0, gf, gb)                               # (2, 4H) stacked
        ig = jax.nn.sigmoid(g2[:, 0:H])
        fg = jax.nn.sigmoid(g2[:, H:2 * H])
        gg = jnp.tanh(g2[:, 2 * H:3 * H])
        og = jax.nn.sigmoid(g2[:, 3 * H:4 * H])
        c = fg * c + ig * gg
        h = og * jnp.tanh(c)                                       # (2, H)
        h_fwd_sc[t:t + 1, :] = h[0:1, :]
        h_bwd_sc[rev:rev + 1, :] = h[1:2, :]

    # ---- hidden2tag (split weight avoids an in-kernel concat) ---------------
    feats = (jnp.dot(h_fwd_sc[...], wtagf_ref[...], preferred_element_type=jnp.float32)
             + jnp.dot(h_bwd_sc[...], wtagb_ref[...], preferred_element_type=jnp.float32)
             + btag_ref[...])                                      # (S, T) f32

    # ---- CRF Viterbi forward pass (unrolled, delta kept as a (T,1) column) --
    trans = trans_ref[...]                                         # trans[i,j]=i->j
    eye = (lax.broadcasted_iota(jnp.int32, (T, T), 0)
           == lax.broadcasted_iota(jnp.int32, (T, T), 1))          # hoisted

    def row_to_col(row):                                           # (1,T) -> (T,1)
        return jnp.sum(jnp.where(eye, row, 0.0), axis=1, keepdims=True)

    delta = row_to_col(feats[0:1, :] + trans[start:start + 1, :])  # (T, 1)
    iota_prev = lax.broadcasted_iota(jnp.int32, (T, T), 0)
    bptrs = []
    for t in range(1, S):                                          # fully unrolled
        scores = trans + delta                                     # (T,T): [prev, new]
        m = jnp.max(scores, axis=0, keepdims=True)                 # (1, T)
        bp = jnp.min(jnp.where(scores >= m, iota_prev, T),
                     axis=0, keepdims=True)                        # (1, T) int32
        bptrs.append(bp)
        delta = row_to_col(m + feats[t:t + 1, :])                  # (T, 1)

    final = delta + trans[:, stop:stop + 1]                        # (T, 1)
    maxv = jnp.max(final, axis=0, keepdims=True)                   # (1, 1)
    iota_col = lax.broadcasted_iota(jnp.int32, (T, 1), 0)
    last = jnp.min(jnp.where(final >= maxv, iota_col, T),
                   axis=0, keepdims=True)                          # (1, 1) int32

    # ---- in-kernel backtracking (vectorized one-hot selection) --------------
    pos_iota = lax.broadcasted_iota(jnp.int32, (1, S), 1)
    lane_iota = lax.broadcasted_iota(jnp.int32, (1, T), 1)
    cur = last
    tags_row = jnp.where(pos_iota == (S - 1), cur, 0)              # (1, S) int32
    for t in range(S - 1, 0, -1):                                  # fully unrolled
        bp = bptrs[t - 1]
        prev = jnp.sum(jnp.where(lane_iota == cur, bp, 0),
                       axis=1, keepdims=True)                      # (1, 1)
        tags_row = tags_row + jnp.where(pos_iota == (t - 1), prev, 0)
        cur = prev

    score_ref[...] = maxv
    tags_ref[...] = tags_row


# ------------------------------- wrapper ---------------------------------------
_SMEM = pl.BlockSpec(memory_space=pltpu.MemorySpace.SMEM)
_VMEM = pl.BlockSpec(memory_space=pltpu.MemorySpace.VMEM)


@jax.jit
def lstm_tagger_forward(words, params):
    """score, tag_seq = LSTMTagger.forward([words, chars]) (eval-mode dropout)."""
    S = words.shape[0]
    H = HIDDEN

    # parameter layout prep (pure-JAX glue; weights pre-transposed / fused).
    wih_cat = jnp.concatenate([params["w_ih_f"].T, params["w_ih_b"].T], axis=1)  # (E, 8H)
    whh_cat = jnp.concatenate([params["w_hh_f"].T, params["w_hh_b"].T], axis=1)  # (H, 8H)
    b_cat = jnp.concatenate([params["b_ih_f"] + params["b_hh_f"],
                             params["b_ih_b"] + params["b_hh_b"]])[None, :]      # (1, 8H)
    wtag_f = params["w_tag"][:, :H].T                                            # (H, T)
    wtag_b = params["w_tag"][:, H:].T                                            # (H, T)
    btag = params["b_tag"][None, :]                                              # (1, T)

    # CRF transitions with standard constraint mask (no -> START, no STOP ->).
    trans = params["transitions"]
    trans = trans.at[:, START].set(NEG).at[STOP, :].set(NEG)

    score, tags = pl.pallas_call(
        lstm_tagger_crf_kernel,
        out_shape=(jax.ShapeDtypeStruct((1, 1), jnp.float32),
                   jax.ShapeDtypeStruct((1, S), jnp.int32)),
        in_specs=[_SMEM] + [_VMEM] * 8,
        out_specs=(_VMEM, _VMEM),
        scratch_shapes=[pltpu.VMEM((S, EMB_DIM), jnp.float32),
                        pltpu.VMEM((S, HIDDEN), jnp.float32),
                        pltpu.VMEM((S, HIDDEN), jnp.float32)],
    )(words.astype(jnp.int32),
      params["word_emb"],
      wih_cat.astype(jnp.bfloat16),    # bf16 MXU feed, f32 accumulate
      whh_cat.astype(jnp.bfloat16),
      b_cat, wtag_f, wtag_b, btag, trans)

    return score[0, 0], tags[0]


# --------------------------------- main -----------------------------------------
if __name__ == "__main__":
    key = jax.random.PRNGKey(0)
    ks = jax.random.split(key, 14)

    emb_scale = float(jnp.sqrt(3.0 / EMB_DIM))
    u_lstm = 1.0 / float(jnp.sqrt(HIDDEN))
    u_lin = 1.0 / float(jnp.sqrt(2 * HIDDEN))

    def uni(k, shape, s):
        return jax.random.uniform(k, shape, jnp.float32, -s, s)

    params = {
        "word_emb": uni(ks[0], (VOCAB, EMB_DIM), emb_scale),
        # forward-direction LSTM (PyTorch shapes, gate order i,f,g,o)
        "w_ih_f": uni(ks[1], (4 * HIDDEN, EMB_DIM), u_lstm),
        "w_hh_f": uni(ks[2], (4 * HIDDEN, HIDDEN), u_lstm),
        "b_ih_f": uni(ks[3], (4 * HIDDEN,), u_lstm),
        "b_hh_f": uni(ks[4], (4 * HIDDEN,), u_lstm),
        # backward-direction LSTM
        "w_ih_b": uni(ks[5], (4 * HIDDEN, EMB_DIM), u_lstm),
        "w_hh_b": uni(ks[6], (4 * HIDDEN, HIDDEN), u_lstm),
        "b_ih_b": uni(ks[7], (4 * HIDDEN,), u_lstm),
        "b_hh_b": uni(ks[8], (4 * HIDDEN,), u_lstm),
        # hidden2tag: Linear(2H -> TAGSET)
        "w_tag": uni(ks[9], (TAGSET, 2 * HIDDEN), u_lin),
        "b_tag": uni(ks[10], (TAGSET,), u_lin),
        # CRF transition matrix: trans[i, j] = score(i -> j)
        "transitions": uni(ks[11], (TAGSET, TAGSET), 0.1),
    }

    words = jax.random.randint(ks[12], (SEQ,), 0, VOCAB, dtype=jnp.int32)

    score, tag_seq = lstm_tagger_forward(words, params)
    jax.block_until_ready((score, tag_seq))
    assert tag_seq.shape == (SEQ,)
    assert score.shape == ()
    print("KERNEL_OK")
</pallas_src>

<mosaic_0001>
module attributes {stable_mosaic.version = 11 : i64} {
  func.func @lstm_tagger_crf_kernel(%arg0: memref<8xi32, #tpu.memory_space<smem>>, %arg1: memref<50x32xf32, #tpu.memory_space<vmem>>, %arg2: memref<32x256xbf16, #tpu.memory_space<vmem>>, %arg3: memref<32x256xbf16, #tpu.memory_space<vmem>>, %arg4: memref<1x256xf32, #tpu.memory_space<vmem>>, %arg5: memref<32x8xf32, #tpu.memory_space<vmem>>, %arg6: memref<32x8xf32, #tpu.memory_space<vmem>>, %arg7: memref<1x8xf32, #tpu.memory_space<vmem>>, %arg8: memref<8x8xf32, #tpu.memory_space<vmem>>, %arg9: memref<1x1xf32, #tpu.memory_space<vmem>>, %arg10: memref<1x8xi32, #tpu.memory_space<vmem>>, %arg11: memref<8x32xf32, #tpu.memory_space<vmem>>, %arg12: memref<8x32xf32, #tpu.memory_space<vmem>>, %arg13: memref<8x32xf32, #tpu.memory_space<vmem>>) attributes {dimension_semantics = [], scalar_prefetch = 0 : i64, scratch_operands = 3 : i64, tpu.core_type = #tpu.core_type<tc>} {
    %c0 = arith.constant 0 : index
    %0 = memref.load %arg0[%c0] : memref<8xi32, #tpu.memory_space<smem>>
    %1 = arith.index_cast %0 : i32 to index
    %c0_0 = arith.constant 0 : index
    %2 = vector.load %arg1[%1, %c0_0] : memref<50x32xf32, #tpu.memory_space<vmem>>, vector<1x32xf32>
    %c0_1 = arith.constant 0 : index
    %c0_2 = arith.constant 0 : index
    %3 = vector.load %arg11[%c0_1, %c0_2] : memref<8x32xf32, #tpu.memory_space<vmem>>, vector<1x32xf32>
    tpu.vector_store %arg11[%c0_1, %c0_2], %2 {strides = array<i32>} : memref<8x32xf32, #tpu.memory_space<vmem>>, vector<1x32xf32>,
    %c1 = arith.constant 1 : index
    %4 = memref.load %arg0[%c1] : memref<8xi32, #tpu.memory_space<smem>>
    %5 = arith.index_cast %4 : i32 to index
    %c0_3 = arith.constant 0 : index
    %6 = vector.load %arg1[%5, %c0_3] : memref<50x32xf32, #tpu.memory_space<vmem>>, vector<1x32xf32>
    %c1_4 = arith.constant 1 : index
    %c0_5 = arith.constant 0 : index
    %7 = vector.load %arg11[%c1_4, %c0_5] : memref<8x32xf32, #tpu.memory_space<vmem>>, vector<1x32xf32>
    tpu.vector_store %arg11[%c1_4, %c0_5], %6 {strides = array<i32>} : memref<8x32xf32, #tpu.memory_space<vmem>>, vector<1x32xf32>,
    %c2 = arith.constant 2 : index
    %8 = memref.load %arg0[%c2] : memref<8xi32, #tpu.memory_space<smem>>
    %9 = arith.index_cast %8 : i32 to index
    %c0_6 = arith.constant 0 : index
    %10 = vector.load %arg1[%9, %c0_6] : memref<50x32xf32, #tpu.memory_space<vmem>>, vector<1x32xf32>
    %c2_7 = arith.constant 2 : index
    %c0_8 = arith.constant 0 : index
    %11 = vector.load %arg11[%c2_7, %c0_8] : memref<8x32xf32, #tpu.memory_space<vmem>>, vector<1x32xf32>
    tpu.vector_store %arg11[%c2_7, %c0_8], %10 {strides = array<i32>} : memref<8x32xf32, #tpu.memory_space<vmem>>, vector<1x32xf32>,
    %c3 = arith.constant 3 : index
    %12 = memref.load %arg0[%c3] : memref<8xi32, #tpu.memory_space<smem>>
    %13 = arith.index_cast %12 : i32 to index
    %c0_9 = arith.constant 0 : index
    %14 = vector.load %arg1[%13, %c0_9] : memref<50x32xf32, #tpu.memory_space<vmem>>, vector<1x32xf32>
    %c3_10 = arith.constant 3 : index
    %c0_11 = arith.constant 0 : index
    %15 = vector.load %arg11[%c3_10, %c0_11] : memref<8x32xf32, #tpu.memory_space<vmem>>, vector<1x32xf32>
    tpu.vector_store %arg11[%c3_10, %c0_11], %14 {strides = array<i32>} : memref<8x32xf32, #tpu.memory_space<vmem>>, vector<1x32xf32>,
    %c4 = arith.constant 4 : index
    %16 = memref.load %arg0[%c4] : memref<8xi32, #tpu.memory_space<smem>>
    %17 = arith.index_cast %16 : i32 to index
    %c0_12 = arith.constant 0 : index
    %18 = vector.load %arg1[%17, %c0_12] : memref<50x32xf32, #tpu.memory_space<vmem>>, vector<1x32xf32>
    %c4_13 = arith.constant 4 : index
    %c0_14 = arith.constant 0 : index
    %19 = vector.load %arg11[%c4_13, %c0_14] : memref<8x32xf32, #tpu.memory_space<vmem>>, vector<1x32xf32>
    tpu.vector_store %arg11[%c4_13, %c0_14], %18 {strides = array<i32>} : memref<8x32xf32, #tpu.memory_space<vmem>>, vector<1x32xf32>,
    %c5 = arith.constant 5 : index
    %20 = memref.load %arg0[%c5] : memref<8xi32, #tpu.memory_space<smem>>
    %21 = arith.index_cast %20 : i32 to index
    %c0_15 = arith.constant 0 : index
    %22 = vector.load %arg1[%21, %c0_15] : memref<50x32xf32, #tpu.memory_space<vmem>>, vector<1x32xf32>
    %c5_16 = arith.constant 5 : index
    %c0_17 = arith.constant 0 : index
    %23 = vector.load %arg11[%c5_16, %c0_17] : memref<8x32xf32, #tpu.memory_space<vmem>>, vector<1x32xf32>
    tpu.vector_store %arg11[%c5_16, %c0_17], %22 {strides = array<i32>} : memref<8x32xf32, #tpu.memory_space<vmem>>, vector<1x32xf32>,
    %c6 = arith.constant 6 : index
    %24 = memref.load %arg0[%c6] : memref<8xi32, #tpu.memory_space<smem>>
    %25 = arith.index_cast %24 : i32 to index
    %c0_18 = arith.constant 0 : index
    %26 = vector.load %arg1[%25, %c0_18] : memref<50x32xf32, #tpu.memory_space<vmem>>, vector<1x32xf32>
    %c6_19 = arith.constant 6 : index
    %c0_20 = arith.constant 0 : index
    %27 = vector.load %arg11[%c6_19, %c0_20] : memref<8x32xf32, #tpu.memory_space<vmem>>, vector<1x32xf32>
    tpu.vector_store %arg11[%c6_19, %c0_20], %26 {strides = array<i32>} : memref<8x32xf32, #tpu.memory_space<vmem>>, vector<1x32xf32>,
    %c7 = arith.constant 7 : index
    %28 = memref.load %arg0[%c7] : memref<8xi32, #tpu.memory_space<smem>>
    %29 = arith.index_cast %28 : i32 to index
    %c0_21 = arith.constant 0 : index
    %30 = vector.load %arg1[%29, %c0_21] : memref<50x32xf32, #tpu.memory_space<vmem>>, vector<1x32xf32>
    %c7_22 = arith.constant 7 : index
    %c0_23 = arith.constant 0 : index
    %31 = vector.load %arg11[%c7_22, %c0_23] : memref<8x32xf32, #tpu.memory_space<vmem>>, vector<1x32xf32>
    tpu.vector_store %arg11[%c7_22, %c0_23], %30 {strides = array<i32>} : memref<8x32xf32, #tpu.memory_space<vmem>>, vector<1x32xf32>,
    %c0_24 = arith.constant 0 : index
    %c0_25 = arith.constant 0 : index
    %32 = vector.load %arg11[%c0_24, %c0_25] : memref<8x32xf32, #tpu.memory_space<vmem>>, vector<8x32xf32>
    %33 = arith.truncf %32 : vector<8x32xf32> to vector<8x32xbf16>
    %c0_26 = arith.constant 0 : index
    %c0_27 = arith.constant 0 : index
    %34 = vector.load %arg2[%c0_26, %c0_27] : memref<32x256xbf16, #tpu.memory_space<vmem>>, vector<32x256xbf16>
    %cst = arith.constant dense<0.000000e+00> : vector<8x256xf32>
    %35 = tpu.matmul %33, %34, %cst {dimension_numbers = #tpu.dot_dimension_numbers<[1], [0], [0], [1], [0, 0, 1, 1], [], []>} : vector<8x32xbf16>, vector<32x256xbf16>, vector<8x256xf32> -> vector<8x256xf32>
    %c0_28 = arith.constant 0 : index
    %c0_29 = arith.constant 0 : index
    %36 = vector.load %arg4[%c0_28, %c0_29] : memref<1x256xf32, #tpu.memory_space<vmem>>, vector<1x256xf32>
    %37 = vector.broadcast %36 : vector<1x256xf32> to vector<8x256xf32>
    %38 = arith.addf %35, %37 : vector<8x256xf32>
    %c0_30 = arith.constant 0 : index
    %c0_31 = arith.constant 0 : index
    %39 = vector.load %arg3[%c0_30, %c0_31] : memref<32x256xbf16, #tpu.memory_space<vmem>>, vector<32x256xbf16>
    %40 = tpu.iota {dimensions = array<i32: 0>} : vector<2x128xi32>
    %c0_i32 = arith.constant 0 : i32
    %41 = vector.broadcast %c0_i32 : i32 to vector<2x128xi32>
    %42 = arith.cmpi eq, %40, %41 : vector<2x128xi32>
    %cst_32 = arith.constant 0.000000e+00 : f32
    %43 = vector.broadcast %cst_32 : f32 to vector<2x32xf32>
    %44 = vector.extract_strided_slice %38 {offsets = [0, 0], sizes = [1, 128], strides = [1, 1]} : vector<8x256xf32> to vector<1x128xf32>
    %45 = vector.extract_strided_slice %38 {offsets = [7, 128], sizes = [1, 128], strides = [1, 1]} : vector<8x256xf32> to vector<1x128xf32>
    %46 = vector.shape_cast %44 : vector<1x128xf32> to vector<1x128xf32>
    %47 = vector.broadcast %46 : vector<1x128xf32> to vector<2x128xf32>
    %48 = vector.shape_cast %45 : vector<1x128xf32> to vector<1x128xf32>
    %49 = vector.broadcast %48 : vector<1x128xf32> to vector<2x128xf32>
    %50 = arith.select %42, %47, %49 : vector<2x128xi1>, vector<2x128xf32>
    %51 = vector.extract_strided_slice %50 {offsets = [0, 0], sizes = [2, 32], strides = [1, 1]} : vector<2x128xf32> to vector<2x32xf32>
    %52 = arith.negf %51 : vector<2x32xf32>
    %53 = math.exp %52 : vector<2x32xf32>
    %cst_33 = arith.constant 1.000000e+00 : f32
    %54 = vector.broadcast %cst_33 : f32 to vector<2x32xf32>
    %55 = arith.addf %54, %53 : vector<2x32xf32>
    %56 = arith.divf %54, %55 : vector<2x32xf32>
    %57 = vector.extract_strided_slice %50 {offsets = [0, 32], sizes = [2, 32], strides = [1, 1]} : vector<2x128xf32> to vector<2x32xf32>
    %58 = arith.negf %57 : vector<2x32xf32>
    %59 = math.exp %58 : vector<2x32xf32>
    %cst_34 = arith.constant 1.000000e+00 : f32
    %60 = vector.broadcast %cst_34 : f32 to vector<2x32xf32>
    %61 = arith.addf %60, %59 : vector<2x32xf32>
    %62 = arith.divf %60, %61 : vector<2x32xf32>
    %63 = vector.extract_strided_slice %50 {offsets = [0, 64], sizes = [2, 32], strides = [1, 1]} : vector<2x128xf32> to vector<2x32xf32>
    %64 = math.tanh %63 : vector<2x32xf32>
    %65 = vector.extract_strided_slice %50 {offsets = [0, 96], sizes = [2, 32], strides = [1, 1]} : vector<2x128xf32> to vector<2x32xf32>
    %66 = arith.negf %65 : vector<2x32xf32>
    %67 = math.exp %66 : vector<2x32xf32>
    %cst_35 = arith.constant 1.000000e+00 : f32
    %68 = vector.broadcast %cst_35 : f32 to vector<2x32xf32>
    %69 = arith.addf %68, %67 : vector<2x32xf32>
    %70 = arith.divf %68, %69 : vector<2x32xf32>
    %71 = arith.mulf %62, %43 : vector<2x32xf32>
    %72 = arith.mulf %56, %64 : vector<2x32xf32>
    %73 = arith.addf %71, %72 : vector<2x32xf32>
    %74 = math.tanh %73 : vector<2x32xf32>
    %75 = arith.mulf %70, %74 : vector<2x32xf32>
    %76 = vector.extract_strided_slice %75 {offsets = [0, 0], sizes = [1, 32], strides = [1, 1]} : vector<2x32xf32> to vector<1x32xf32>
    %c0_36 = arith.constant 0 : index
    %c0_37 = arith.constant 0 : index
    %77 = vector.load %arg12[%c0_36, %c0_37] : memref<8x32xf32, #tpu.memory_space<vmem>>, vector<1x32xf32>
    tpu.vector_store %arg12[%c0_36, %c0_37], %76 {strides = array<i32>} : memref<8x32xf32, #tpu.memory_space<vmem>>, vector<1x32xf32>,
    %78 = vector.extract_strided_slice %75 {offsets = [1, 0], sizes = [1, 32], strides = [1, 1]} : vector<2x32xf32> to vector<1x32xf32>
    %c7_38 = arith.constant 7 : index
    %c0_39 = arith.constant 0 : index
    %79 = vector.load %arg13[%c7_38, %c0_39] : memref<8x32xf32, #tpu.memory_space<vmem>>, vector<1x32xf32>
    tpu.vector_store %arg13[%c7_38, %c0_39], %78 {strides = array<i32>} : memref<8x32xf32, #tpu.memory_space<vmem>>, vector<1x32xf32>,
    %80 = vector.extract_strided_slice %38 {offsets = [1, 0], sizes = [1, 128], strides = [1, 1]} : vector<8x256xf32> to vector<1x128xf32>
    %81 = vector.extract_strided_slice %38 {offsets = [6, 128], sizes = [1, 128], strides = [1, 1]} : vector<8x256xf32> to vector<1x128xf32>
    %82 = arith.truncf %75 : vector<2x32xf32> to vector<2x32xbf16>
    %cst_40 = arith.constant dense<0.000000e+00> : vector<2x256xf32>
    %83 = tpu.matmul %82, %39, %cst_40 {dimension_numbers = #tpu.dot_dimension_numbers<[1], [0], [0], [1], [0, 0, 1, 1], [], []>} : vector<2x32xbf16>, vector<32x256xbf16>, vector<2x256xf32> -> vector<2x256xf32>
    %84 = vector.extract_strided_slice %83 {offsets = [0, 0], sizes = [1, 128], strides = [1, 1]} : vector<2x256xf32> to vector<1x128xf32>
    %85 = arith.addf %80, %84 : vector<1x128xf32>
    %86 = vector.extract_strided_slice %83 {offsets = [1, 128], sizes = [1, 128], strides = [1, 1]} : vector<2x256xf32> to vector<1x128xf32>
    %87 = arith.addf %81, %86 : vector<1x128xf32>
    %88 = vector.shape_cast %85 : vector<1x128xf32> to vector<1x128xf32>
    %89 = vector.broadcast %88 : vector<1x128xf32> to vector<2x128xf32>
    %90 = vector.shape_cast %87 : vector<1x128xf32> to vector<1x128xf32>
    %91 = vector.broadcast %90 : vector<1x128xf32> to vector<2x128xf32>
    %92 = arith.select %42, %89, %91 : vector<2x128xi1>, vector<2x128xf32>
    %93 = vector.extract_strided_slice %92 {offsets = [0, 0], sizes = [2, 32], strides = [1, 1]} : vector<2x128xf32> to vector<2x32xf32>
    %94 = arith.negf %93 : vector<2x32xf32>
    %95 = math.exp %94 : vector<2x32xf32>
    %cst_41 = arith.constant 1.000000e+00 : f32
    %96 = vector.broadcast %cst_41 : f32 to vector<2x32xf32>
    %97 = arith.addf %96, %95 : vector<2x32xf32>
    %98 = arith.divf %96, %97 : vector<2x32xf32>
    %99 = vector.extract_strided_slice %92 {offsets = [0, 32], sizes = [2, 32], strides = [1, 1]} : vector<2x128xf32> to vector<2x32xf32>
    %100 = arith.negf %99 : vector<2x32xf32>
    %101 = math.exp %100 : vector<2x32xf32>
    %cst_42 = arith.constant 1.000000e+00 : f32
    %102 = vector.broadcast %cst_42 : f32 to vector<2x32xf32>
    %103 = arith.addf %102, %101 : vector<2x32xf32>
    %104 = arith.divf %102, %103 : vector<2x32xf32>
    %105 = vector.extract_strided_slice %92 {offsets = [0, 64], sizes = [2, 32], strides = [1, 1]} : vector<2x128xf32> to vector<2x32xf32>
    %106 = math.tanh %105 : vector<2x32xf32>
    %107 = vector.extract_strided_slice %92 {offsets = [0, 96], sizes = [2, 32], strides = [1, 1]} : vector<2x128xf32> to vector<2x32xf32>
    %108 = arith.negf %107 : vector<2x32xf32>
    %109 = math.exp %108 : vector<2x32xf32>
    %cst_43 = arith.constant 1.000000e+00 : f32
    %110 = vector.broadcast %cst_43 : f32 to vector<2x32xf32>
    %111 = arith.addf %110, %109 : vector<2x32xf32>
    %112 = arith.divf %110, %111 : vector<2x32xf32>
    %113 = arith.mulf %104, %73 : vector<2x32xf32>
    %114 = arith.mulf %98, %106 : vector<2x32xf32>
    %115 = arith.addf %113, %114 : vector<2x32xf32>
    %116 = math.tanh %115 : vector<2x32xf32>
    %117 = arith.mulf %112, %116 : vector<2x32xf32>
    %118 = vector.extract_strided_slice %117 {offsets = [0, 0], sizes = [1, 32], strides = [1, 1]} : vector<2x32xf32> to vector<1x32xf32>
    %c1_44 = arith.constant 1 : index
    %c0_45 = arith.constant 0 : index
    %119 = vector.load %arg12[%c1_44, %c0_45] : memref<8x32xf32, #tpu.memory_space<vmem>>, vector<1x32xf32>
    tpu.vector_store %arg12[%c1_44, %c0_45], %118 {strides = array<i32>} : memref<8x32xf32, #tpu.memory_space<vmem>>, vector<1x32xf32>,
    %120 = vector.extract_strided_slice %117 {offsets = [1, 0], sizes = [1, 32], strides = [1, 1]} : vector<2x32xf32> to vector<1x32xf32>
    %c6_46 = arith.constant 6 : index
    %c0_47 = arith.constant 0 : index
    %121 = vector.load %arg13[%c6_46, %c0_47] : memref<8x32xf32, #tpu.memory_space<vmem>>, vector<1x32xf32>
    tpu.vector_store %arg13[%c6_46, %c0_47], %120 {strides = array<i32>} : memref<8x32xf32, #tpu.memory_space<vmem>>, vector<1x32xf32>,
    %122 = vector.extract_strided_slice %38 {offsets = [2, 0], sizes = [1, 128], strides = [1, 1]} : vector<8x256xf32> to vector<1x128xf32>
    %123 = vector.extract_strided_slice %38 {offsets = [5, 128], sizes = [1, 128], strides = [1, 1]} : vector<8x256xf32> to vector<1x128xf32>
    %124 = arith.truncf %117 : vector<2x32xf32> to vector<2x32xbf16>
    %cst_48 = arith.constant dense<0.000000e+00> : vector<2x256xf32>
    %125 = tpu.matmul %124, %39, %cst_48 {dimension_numbers = #tpu.dot_dimension_numbers<[1], [0], [0], [1], [0, 0, 1, 1], [], []>} : vector<2x32xbf16>, vector<32x256xbf16>, vector<2x256xf32> -> vector<2x256xf32>
    %126 = vector.extract_strided_slice %125 {offsets = [0, 0], sizes = [1, 128], strides = [1, 1]} : vector<2x256xf32> to vector<1x128xf32>
    %127 = arith.addf %122, %126 : vector<1x128xf32>
    %128 = vector.extract_strided_slice %125 {offsets = [1, 128], sizes = [1, 128], strides = [1, 1]} : vector<2x256xf32> to vector<1x128xf32>
    %129 = arith.addf %123, %128 : vector<1x128xf32>
    %130 = vector.shape_cast %127 : vector<1x128xf32> to vector<1x128xf32>
    %131 = vector.broadcast %130 : vector<1x128xf32> to vector<2x128xf32>
    %132 = vector.shape_cast %129 : vector<1x128xf32> to vector<1x128xf32>
    %133 = vector.broadcast %132 : vector<1x128xf32> to vector<2x128xf32>
    %134 = arith.select %42, %131, %133 : vector<2x128xi1>, vector<2x128xf32>
    %135 = vector.extract_strided_slice %134 {offsets = [0, 0], sizes = [2, 32], strides = [1, 1]} : vector<2x128xf32> to vector<2x32xf32>
    %136 = arith.negf %135 : vector<2x32xf32>
    %137 = math.exp %136 : vector<2x32xf32>
    %cst_49 = arith.constant 1.000000e+00 : f32
    %138 = vector.broadcast %cst_49 : f32 to vector<2x32xf32>
    %139 = arith.addf %138, %137 : vector<2x32xf32>
    %140 = arith.divf %138, %139 : vector<2x32xf32>
    %141 = vector.extract_strided_slice %134 {offsets = [0, 32], sizes = [2, 32], strides = [1, 1]} : vector<2x128xf32> to vector<2x32xf32>
    %142 = arith.negf %141 : vector<2x32xf32>
    %143 = math.exp %142 : vector<2x32xf32>
    %cst_50 = arith.constant 1.000000e+00 : f32
    %144 = vector.broadcast %cst_50 : f32 to vector<2x32xf32>
    %145 = arith.addf %144, %143 : vector<2x32xf32>
    %146 = arith.divf %144, %145 : vector<2x32xf32>
    %147 = vector.extract_strided_slice %134 {offsets = [0, 64], sizes = [2, 32], strides = [1, 1]} : vector<2x128xf32> to vector<2x32xf32>
    %148 = math.tanh %147 : vector<2x32xf32>
    %149 = vector.extract_strided_slice %134 {offsets = [0, 96], sizes = [2, 32], strides = [1, 1]} : vector<2x128xf32> to vector<2x32xf32>
    %150 = arith.negf %149 : vector<2x32xf32>
    %151 = math.exp %150 : vector<2x32xf32>
    %cst_51 = arith.constant 1.000000e+00 : f32
    %152 = vector.broadcast %cst_51 : f32 to vector<2x32xf32>
    %153 = arith.addf %152, %151 : vector<2x32xf32>
    %154 = arith.divf %152, %153 : vector<2x32xf32>
    %155 = arith.mulf %146, %115 : vector<2x32xf32>
    %156 = arith.mulf %140, %148 : vector<2x32xf32>
    %157 = arith.addf %155, %156 : vector<2x32xf32>
    %158 = math.tanh %157 : vector<2x32xf32>
    %159 = arith.mulf %154, %158 : vector<2x32xf32>
    %160 = vector.extract_strided_slice %159 {offsets = [0, 0], sizes = [1, 32], strides = [1, 1]} : vector<2x32xf32> to vector<1x32xf32>
    %c2_52 = arith.constant 2 : index
    %c0_53 = arith.constant 0 : index
    %161 = vector.load %arg12[%c2_52, %c0_53] : memref<8x32xf32, #tpu.memory_space<vmem>>, vector<1x32xf32>
    tpu.vector_store %arg12[%c2_52, %c0_53], %160 {strides = array<i32>} : memref<8x32xf32, #tpu.memory_space<vmem>>, vector<1x32xf32>,
    %162 = vector.extract_strided_slice %159 {offsets = [1, 0], sizes = [1, 32], strides = [1, 1]} : vector<2x32xf32> to vector<1x32xf32>
    %c5_54 = arith.constant 5 : index
    %c0_55 = arith.constant 0 : index
    %163 = vector.load %arg13[%c5_54, %c0_55] : memref<8x32xf32, #tpu.memory_space<vmem>>, vector<1x32xf32>
    tpu.vector_store %arg13[%c5_54, %c0_55], %162 {strides = array<i32>} : memref<8x32xf32, #tpu.memory_space<vmem>>, vector<1x32xf32>,
    %164 = vector.extract_strided_slice %38 {offsets = [3, 0], sizes = [1, 128], strides = [1, 1]} : vector<8x256xf32> to vector<1x128xf32>
    %165 = vector.extract_strided_slice %38 {offsets = [4, 128], sizes = [1, 128], strides = [1, 1]} : vector<8x256xf32> to vector<1x128xf32>
    %166 = arith.truncf %159 : vector<2x32xf32> to vector<2x32xbf16>
    %cst_56 = arith.constant dense<0.000000e+00> : vector<2x256xf32>
    %167 = tpu.matmul %166, %39, %cst_56 {dimension_numbers = #tpu.dot_dimension_numbers<[1], [0], [0], [1], [0, 0, 1, 1], [], []>} : vector<2x32xbf16>, vector<32x256xbf16>, vector<2x256xf32> -> vector<2x256xf32>
    %168 = vector.extract_strided_slice %167 {offsets = [0, 0], sizes = [1, 128], strides = [1, 1]} : vector<2x256xf32> to vector<1x128xf32>
    %169 = arith.addf %164, %168 : vector<1x128xf32>
    %170 = vector.extract_strided_slice %167 {offsets = [1, 128], sizes = [1, 128], strides = [1, 1]} : vector<2x256xf32> to vector<1x128xf32>
    %171 = arith.addf %165, %170 : vector<1x128xf32>
    %172 = vector.shape_cast %169 : vector<1x128xf32> to vector<1x128xf32>
    %173 = vector.broadcast %172 : vector<1x128xf32> to vector<2x128xf32>
    %174 = vector.shape_cast %171 : vector<1x128xf32> to vector<1x128xf32>
    %175 = vector.broadcast %174 : vector<1x128xf32> to vector<2x128xf32>
    %176 = arith.select %42, %173, %175 : vector<2x128xi1>, vector<2x128xf32>
    %177 = vector.extract_strided_slice %176 {offsets = [0, 0], sizes = [2, 32], strides = [1, 1]} : vector<2x128xf32> to vector<2x32xf32>
    %178 = arith.negf %177 : vector<2x32xf32>
    %179 = math.exp %178 : vector<2x32xf32>
    %cst_57 = arith.constant 1.000000e+00 : f32
    %180 = vector.broadcast %cst_57 : f32 to vector<2x32xf32>
    %181 = arith.addf %180, %179 : vector<2x32xf32>
    %182 = arith.divf %180, %181 : vector<2x32xf32>
    %183 = vector.extract_strided_slice %176 {offsets = [0, 32], sizes = [2, 32], strides = [1, 1]} : vector<2x128xf32> to vector<2x32xf32>
    %184 = arith.negf %183 : vector<2x32xf32>
    %185 = math.exp %184 : vector<2x32xf32>
    %cst_58 = arith.constant 1.000000e+00 : f32
    %186 = vector.broadcast %cst_58 : f32 to vector<2x32xf32>
    %187 = arith.addf %186, %185 : vector<2x32xf32>
    %188 = arith.divf %186, %187 : vector<2x32xf32>
    %189 = vector.extract_strided_slice %176 {offsets = [0, 64], sizes = [2, 32], strides = [1, 1]} : vector<2x128xf32> to vector<2x32xf32>
    %190 = math.tanh %189 : vector<2x32xf32>
    %191 = vector.extract_strided_slice %176 {offsets = [0, 96], sizes = [2, 32], strides = [1, 1]} : vector<2x128xf32> to vector<2x32xf32>
    %192 = arith.negf %191 : vector<2x32xf32>
    %193 = math.exp %192 : vector<2x32xf32>
    %cst_59 = arith.constant 1.000000e+00 : f32
    %194 = vector.broadcast %cst_59 : f32 to vector<2x32xf32>
    %195 = arith.addf %194, %193 : vector<2x32xf32>
    %196 = arith.divf %194, %195 : vector<2x32xf32>
    %197 = arith.mulf %188, %157 : vector<2x32xf32>
    %198 = arith.mulf %182, %190 : vector<2x32xf32>
    %199 = arith.addf %197, %198 : vector<2x32xf32>
    %200 = math.tanh %199 : vector<2x32xf32>
    %201 = arith.mulf %196, %200 : vector<2x32xf32>
    %202 = vector.extract_strided_slice %201 {offsets = [0, 0], sizes = [1, 32], strides = [1, 1]} : vector<2x32xf32> to vector<1x32xf32>
    %c3_60 = arith.constant 3 : index
    %c0_61 = arith.constant 0 : index
    %203 = vector.load %arg12[%c3_60, %c0_61] : memref<8x32xf32, #tpu.memory_space<vmem>>, vector<1x32xf32>
    tpu.vector_store %arg12[%c3_60, %c0_61], %202 {strides = array<i32>} : memref<8x32xf32, #tpu.memory_space<vmem>>, vector<1x32xf32>,
    %204 = vector.extract_strided_slice %201 {offsets = [1, 0], sizes = [1, 32], strides = [1, 1]} : vector<2x32xf32> to vector<1x32xf32>
    %c4_62 = arith.constant 4 : index
    %c0_63 = arith.constant 0 : index
    %205 = vector.load %arg13[%c4_62, %c0_63] : memref<8x32xf32, #tpu.memory_space<vmem>>, vector<1x32xf32>
    tpu.vector_store %arg13[%c4_62, %c0_63], %204 {strides = array<i32>} : memref<8x32xf32, #tpu.memory_space<vmem>>, vector<1x32xf32>,
    %206 = vector.extract_strided_slice %38 {offsets = [4, 0], sizes = [1, 128], strides = [1, 1]} : vector<8x256xf32> to vector<1x128xf32>
    %207 = vector.extract_strided_slice %38 {offsets = [3, 128], sizes = [1, 128], strides = [1, 1]} : vector<8x256xf32> to vector<1x128xf32>
    %208 = arith.truncf %201 : vector<2x32xf32> to vector<2x32xbf16>
    %cst_64 = arith.constant dense<0.000000e+00> : vector<2x256xf32>
    %209 = tpu.matmul %208, %39, %cst_64 {dimension_numbers = #tpu.dot_dimension_numbers<[1], [0], [0], [1], [0, 0, 1, 1], [], []>} : vector<2x32xbf16>, vector<32x256xbf16>, vector<2x256xf32> -> vector<2x256xf32>
    %210 = vector.extract_strided_slice %209 {offsets = [0, 0], sizes = [1, 128], strides = [1, 1]} : vector<2x256xf32> to vector<1x128xf32>
    %211 = arith.addf %206, %210 : vector<1x128xf32>
    %212 = vector.extract_strided_slice %209 {offsets = [1, 128], sizes = [1, 128], strides = [1, 1]} : vector<2x256xf32> to vector<1x128xf32>
    %213 = arith.addf %207, %212 : vector<1x128xf32>
    %214 = vector.shape_cast %211 : vector<1x128xf32> to vector<1x128xf32>
    %215 = vector.broadcast %214 : vector<1x128xf32> to vector<2x128xf32>
    %216 = vector.shape_cast %213 : vector<1x128xf32> to vector<1x128xf32>
    %217 = vector.broadcast %216 : vector<1x128xf32> to vector<2x128xf32>
    %218 = arith.select %42, %215, %217 : vector<2x128xi1>, vector<2x128xf32>
    %219 = vector.extract_strided_slice %218 {offsets = [0, 0], sizes = [2, 32], strides = [1, 1]} : vector<2x128xf32> to vector<2x32xf32>
    %220 = arith.negf %219 : vector<2x32xf32>
    %221 = math.exp %220 : vector<2x32xf32>
    %cst_65 = arith.constant 1.000000e+00 : f32
    %222 = vector.broadcast %cst_65 : f32 to vector<2x32xf32>
    %223 = arith.addf %222, %221 : vector<2x32xf32>
    %224 = arith.divf %222, %223 : vector<2x32xf32>
    %225 = vector.extract_strided_slice %218 {offsets = [0, 32], sizes = [2, 32], strides = [1, 1]} : vector<2x128xf32> to vector<2x32xf32>
    %226 = arith.negf %225 : vector<2x32xf32>
    %227 = math.exp %226 : vector<2x32xf32>
    %cst_66 = arith.constant 1.000000e+00 : f32
    %228 = vector.broadcast %cst_66 : f32 to vector<2x32xf32>
    %229 = arith.addf %228, %227 : vector<2x32xf32>
    %230 = arith.divf %228, %229 : vector<2x32xf32>
    %231 = vector.extract_strided_slice %218 {offsets = [0, 64], sizes = [2, 32], strides = [1, 1]} : vector<2x128xf32> to vector<2x32xf32>
    %232 = math.tanh %231 : vector<2x32xf32>
    %233 = vector.extract_strided_slice %218 {offsets = [0, 96], sizes = [2, 32], strides = [1, 1]} : vector<2x128xf32> to vector<2x32xf32>
    %234 = arith.negf %233 : vector<2x32xf32>
    %235 = math.exp %234 : vector<2x32xf32>
    %cst_67 = arith.constant 1.000000e+00 : f32
    %236 = vector.broadcast %cst_67 : f32 to vector<2x32xf32>
    %237 = arith.addf %236, %235 : vector<2x32xf32>
    %238 = arith.divf %236, %237 : vector<2x32xf32>
    %239 = arith.mulf %230, %199 : vector<2x32xf32>
    %240 = arith.mulf %224, %232 : vector<2x32xf32>
    %241 = arith.addf %239, %240 : vector<2x32xf32>
    %242 = math.tanh %241 : vector<2x32xf32>
    %243 = arith.mulf %238, %242 : vector<2x32xf32>
    %244 = vector.extract_strided_slice %243 {offsets = [0, 0], sizes = [1, 32], strides = [1, 1]} : vector<2x32xf32> to vector<1x32xf32>
    %c4_68 = arith.constant 4 : index
    %c0_69 = arith.constant 0 : index
    %245 = vector.load %arg12[%c4_68, %c0_69] : memref<8x32xf32, #tpu.memory_space<vmem>>, vector<1x32xf32>
    tpu.vector_store %arg12[%c4_68, %c0_69], %244 {strides = array<i32>} : memref<8x32xf32, #tpu.memory_space<vmem>>, vector<1x32xf32>,
    %246 = vector.extract_strided_slice %243 {offsets = [1, 0], sizes = [1, 32], strides = [1, 1]} : vector<2x32xf32> to vector<1x32xf32>
    %c3_70 = arith.constant 3 : index
    %c0_71 = arith.constant 0 : index
    %247 = vector.load %arg13[%c3_70, %c0_71] : memref<8x32xf32, #tpu.memory_space<vmem>>, vector<1x32xf32>
    tpu.vector_store %arg13[%c3_70, %c0_71], %246 {strides = array<i32>} : memref<8x32xf32, #tpu.memory_space<vmem>>, vector<1x32xf32>,
    %248 = vector.extract_strided_slice %38 {offsets = [5, 0], sizes = [1, 128], strides = [1, 1]} : vector<8x256xf32> to vector<1x128xf32>
    %249 = vector.extract_strided_slice %38 {offsets = [2, 128], sizes = [1, 128], strides = [1, 1]} : vector<8x256xf32> to vector<1x128xf32>
    %250 = arith.truncf %243 : vector<2x32xf32> to vector<2x32xbf16>
    %cst_72 = arith.constant dense<0.000000e+00> : vector<2x256xf32>
    %251 = tpu.matmul %250, %39, %cst_72 {dimension_numbers = #tpu.dot_dimension_numbers<[1], [0], [0], [1], [0, 0, 1, 1], [], []>} : vector<2x32xbf16>, vector<32x256xbf16>, vector<2x256xf32> -> vector<2x256xf32>
    %252 = vector.extract_strided_slice %251 {offsets = [0, 0], sizes = [1, 128], strides = [1, 1]} : vector<2x256xf32> to vector<1x128xf32>
    %253 = arith.addf %248, %252 : vector<1x128xf32>
    %254 = vector.extract_strided_slice %251 {offsets = [1, 128], sizes = [1, 128], strides = [1, 1]} : vector<2x256xf32> to vector<1x128xf32>
    %255 = arith.addf %249, %254 : vector<1x128xf32>
    %256 = vector.shape_cast %253 : vector<1x128xf32> to vector<1x128xf32>
    %257 = vector.broadcast %256 : vector<1x128xf32> to vector<2x128xf32>
    %258 = vector.shape_cast %255 : vector<1x128xf32> to vector<1x128xf32>
    %259 = vector.broadcast %258 : vector<1x128xf32> to vector<2x128xf32>
    %260 = arith.select %42, %257, %259 : vector<2x128xi1>, vector<2x128xf32>
    %261 = vector.extract_strided_slice %260 {offsets = [0, 0], sizes = [2, 32], strides = [1, 1]} : vector<2x128xf32> to vector<2x32xf32>
    %262 = arith.negf %261 : vector<2x32xf32>
    %263 = math.exp %262 : vector<2x32xf32>
    %cst_73 = arith.constant 1.000000e+00 : f32
    %264 = vector.broadcast %cst_73 : f32 to vector<2x32xf32>
    %265 = arith.addf %264, %263 : vector<2x32xf32>
    %266 = arith.divf %264, %265 : vector<2x32xf32>
    %267 = vector.extract_strided_slice %260 {offsets = [0, 32], sizes = [2, 32], strides = [1, 1]} : vector<2x128xf32> to vector<2x32xf32>
    %268 = arith.negf %267 : vector<2x32xf32>
    %269 = math.exp %268 : vector<2x32xf32>
    %cst_74 = arith.constant 1.000000e+00 : f32
    %270 = vector.broadcast %cst_74 : f32 to vector<2x32xf32>
    %271 = arith.addf %270, %269 : vector<2x32xf32>
    %272 = arith.divf %270, %271 : vector<2x32xf32>
    %273 = vector.extract_strided_slice %260 {offsets = [0, 64], sizes = [2, 32], strides = [1, 1]} : vector<2x128xf32> to vector<2x32xf32>
    %274 = math.tanh %273 : vector<2x32xf32>
    %275 = vector.extract_strided_slice %260 {offsets = [0, 96], sizes = [2, 32], strides = [1, 1]} : vector<2x128xf32> to vector<2x32xf32>
    %276 = arith.negf %275 : vector<2x32xf32>
    %277 = math.exp %276 : vector<2x32xf32>
    %cst_75 = arith.constant 1.000000e+00 : f32
    %278 = vector.broadcast %cst_75 : f32 to vector<2x32xf32>
    %279 = arith.addf %278, %277 : vector<2x32xf32>
    %280 = arith.divf %278, %279 : vector<2x32xf32>
    %281 = arith.mulf %272, %241 : vector<2x32xf32>
    %282 = arith.mulf %266, %274 : vector<2x32xf32>
    %283 = arith.addf %281, %282 : vector<2x32xf32>
    %284 = math.tanh %283 : vector<2x32xf32>
    %285 = arith.mulf %280, %284 : vector<2x32xf32>
    %286 = vector.extract_strided_slice %285 {offsets = [0, 0], sizes = [1, 32], strides = [1, 1]} : vector<2x32xf32> to vector<1x32xf32>
    %c5_76 = arith.constant 5 : index
    %c0_77 = arith.constant 0 : index
    %287 = vector.load %arg12[%c5_76, %c0_77] : memref<8x32xf32, #tpu.memory_space<vmem>>, vector<1x32xf32>
    tpu.vector_store %arg12[%c5_76, %c0_77], %286 {strides = array<i32>} : memref<8x32xf32, #tpu.memory_space<vmem>>, vector<1x32xf32>,
    %288 = vector.extract_strided_slice %285 {offsets = [1, 0], sizes = [1, 32], strides = [1, 1]} : vector<2x32xf32> to vector<1x32xf32>
    %c2_78 = arith.constant 2 : index
    %c0_79 = arith.constant 0 : index
    %289 = vector.load %arg13[%c2_78, %c0_79] : memref<8x32xf32, #tpu.memory_space<vmem>>, vector<1x32xf32>
    tpu.vector_store %arg13[%c2_78, %c0_79], %288 {strides = array<i32>} : memref<8x32xf32, #tpu.memory_space<vmem>>, vector<1x32xf32>,
    %290 = vector.extract_strided_slice %38 {offsets = [6, 0], sizes = [1, 128], strides = [1, 1]} : vector<8x256xf32> to vector<1x128xf32>
    %291 = vector.extract_strided_slice %38 {offsets = [1, 128], sizes = [1, 128], strides = [1, 1]} : vector<8x256xf32> to vector<1x128xf32>
    %292 = arith.truncf %285 : vector<2x32xf32> to vector<2x32xbf16>
    %cst_80 = arith.constant dense<0.000000e+00> : vector<2x256xf32>
    %293 = tpu.matmul %292, %39, %cst_80 {dimension_numbers = #tpu.dot_dimension_numbers<[1], [0], [0], [1], [0, 0, 1, 1], [], []>} : vector<2x32xbf16>, vector<32x256xbf16>, vector<2x256xf32> -> vector<2x256xf32>
    %294 = vector.extract_strided_slice %293 {offsets = [0, 0], sizes = [1, 128], strides = [1, 1]} : vector<2x256xf32> to vector<1x128xf32>
    %295 = arith.addf %290, %294 : vector<1x128xf32>
    %296 = vector.extract_strided_slice %293 {offsets = [1, 128], sizes = [1, 128], strides = [1, 1]} : vector<2x256xf32> to vector<1x128xf32>
    %297 = arith.addf %291, %296 : vector<1x128xf32>
    %298 = vector.shape_cast %295 : vector<1x128xf32> to vector<1x128xf32>
    %299 = vector.broadcast %298 : vector<1x128xf32> to vector<2x128xf32>
    %300 = vector.shape_cast %297 : vector<1x128xf32> to vector<1x128xf32>
    %301 = vector.broadcast %300 : vector<1x128xf32> to vector<2x128xf32>
    %302 = arith.select %42, %299, %301 : vector<2x128xi1>, vector<2x128xf32>
    %303 = vector.extract_strided_slice %302 {offsets = [0, 0], sizes = [2, 32], strides = [1, 1]} : vector<2x128xf32> to vector<2x32xf32>
    %304 = arith.negf %303 : vector<2x32xf32>
    %305 = math.exp %304 : vector<2x32xf32>
    %cst_81 = arith.constant 1.000000e+00 : f32
    %306 = vector.broadcast %cst_81 : f32 to vector<2x32xf32>
    %307 = arith.addf %306, %305 : vector<2x32xf32>
    %308 = arith.divf %306, %307 : vector<2x32xf32>
    %309 = vector.extract_strided_slice %302 {offsets = [0, 32], sizes = [2, 32], strides = [1, 1]} : vector<2x128xf32> to vector<2x32xf32>
    %310 = arith.negf %309 : vector<2x32xf32>
    %311 = math.exp %310 : vector<2x32xf32>
    %cst_82 = arith.constant 1.000000e+00 : f32
    %312 = vector.broadcast %cst_82 : f32 to vector<2x32xf32>
    %313 = arith.addf %312, %311 : vector<2x32xf32>
    %314 = arith.divf %312, %313 : vector<2x32xf32>
    %315 = vector.extract_strided_slice %302 {offsets = [0, 64], sizes = [2, 32], strides = [1, 1]} : vector<2x128xf32> to vector<2x32xf32>
    %316 = math.tanh %315 : vector<2x32xf32>
    %317 = vector.extract_strided_slice %302 {offsets = [0, 96], sizes = [2, 32], strides = [1, 1]} : vector<2x128xf32> to vector<2x32xf32>
    %318 = arith.negf %317 : vector<2x32xf32>
    %319 = math.exp %318 : vector<2x32xf32>
    %cst_83 = arith.constant 1.000000e+00 : f32
    %320 = vector.broadcast %cst_83 : f32 to vector<2x32xf32>
    %321 = arith.addf %320, %319 : vector<2x32xf32>
    %322 = arith.divf %320, %321 : vector<2x32xf32>
    %323 = arith.mulf %314, %283 : vector<2x32xf32>
    %324 = arith.mulf %308, %316 : vector<2x32xf32>
    %325 = arith.addf %323, %324 : vector<2x32xf32>
    %326 = math.tanh %325 : vector<2x32xf32>
    %327 = arith.mulf %322, %326 : vector<2x32xf32>
    %328 = vector.extract_strided_slice %327 {offsets = [0, 0], sizes = [1, 32], strides = [1, 1]} : vector<2x32xf32> to vector<1x32xf32>
    %c6_84 = arith.constant 6 : index
    %c0_85 = arith.constant 0 : index
    %329 = vector.load %arg12[%c6_84, %c0_85] : memref<8x32xf32, #tpu.memory_space<vmem>>, vector<1x32xf32>
    tpu.vector_store %arg12[%c6_84, %c0_85], %328 {strides = array<i32>} : memref<8x32xf32, #tpu.memory_space<vmem>>, vector<1x32xf32>,
    %330 = vector.extract_strided_slice %327 {offsets = [1, 0], sizes = [1, 32], strides = [1, 1]} : vector<2x32xf32> to vector<1x32xf32>
    %c1_86 = arith.constant 1 : index
    %c0_87 = arith.constant 0 : index
    %331 = vector.load %arg13[%c1_86, %c0_87] : memref<8x32xf32, #tpu.memory_space<vmem>>, vector<1x32xf32>
    tpu.vector_store %arg13[%c1_86, %c0_87], %330 {strides = array<i32>} : memref<8x32xf32, #tpu.memory_space<vmem>>, vector<1x32xf32>,
    %332 = vector.extract_strided_slice %38 {offsets = [7, 0], sizes = [1, 128], strides = [1, 1]} : vector<8x256xf32> to vector<1x128xf32>
    %333 = vector.extract_strided_slice %38 {offsets = [0, 128], sizes = [1, 128], strides = [1, 1]} : vector<8x256xf32> to vector<1x128xf32>
    %334 = arith.truncf %327 : vector<2x32xf32> to vector<2x32xbf16>
    %cst_88 = arith.constant dense<0.000000e+00> : vector<2x256xf32>
    %335 = tpu.matmul %334, %39, %cst_88 {dimension_numbers = #tpu.dot_dimension_numbers<[1], [0], [0], [1], [0, 0, 1, 1], [], []>} : vector<2x32xbf16>, vector<32x256xbf16>, vector<2x256xf32> -> vector<2x256xf32>
    %336 = vector.extract_strided_slice %335 {offsets = [0, 0], sizes = [1, 128], strides = [1, 1]} : vector<2x256xf32> to vector<1x128xf32>
    %337 = arith.addf %332, %336 : vector<1x128xf32>
    %338 = vector.extract_strided_slice %335 {offsets = [1, 128], sizes = [1, 128], strides = [1, 1]} : vector<2x256xf32> to vector<1x128xf32>
    %339 = arith.addf %333, %338 : vector<1x128xf32>
    %340 = vector.shape_cast %337 : vector<1x128xf32> to vector<1x128xf32>
    %341 = vector.broadcast %340 : vector<1x128xf32> to vector<2x128xf32>
    %342 = vector.shape_cast %339 : vector<1x128xf32> to vector<1x128xf32>
    %343 = vector.broadcast %342 : vector<1x128xf32> to vector<2x128xf32>
    %344 = arith.select %42, %341, %343 : vector<2x128xi1>, vector<2x128xf32>
    %345 = vector.extract_strided_slice %344 {offsets = [0, 0], sizes = [2, 32], strides = [1, 1]} : vector<2x128xf32> to vector<2x32xf32>
    %346 = arith.negf %345 : vector<2x32xf32>
    %347 = math.exp %346 : vector<2x32xf32>
    %cst_89 = arith.constant 1.000000e+00 : f32
    %348 = vector.broadcast %cst_89 : f32 to vector<2x32xf32>
    %349 = arith.addf %348, %347 : vector<2x32xf32>
    %350 = arith.divf %348, %349 : vector<2x32xf32>
    %351 = vector.extract_strided_slice %344 {offsets = [0, 32], sizes = [2, 32], strides = [1, 1]} : vector<2x128xf32> to vector<2x32xf32>
    %352 = arith.negf %351 : vector<2x32xf32>
    %353 = math.exp %352 : vector<2x32xf32>
    %cst_90 = arith.constant 1.000000e+00 : f32
    %354 = vector.broadcast %cst_90 : f32 to vector<2x32xf32>
    %355 = arith.addf %354, %353 : vector<2x32xf32>
    %356 = arith.divf %354, %355 : vector<2x32xf32>
    %357 = vector.extract_strided_slice %344 {offsets = [0, 64], sizes = [2, 32], strides = [1, 1]} : vector<2x128xf32> to vector<2x32xf32>
    %358 = math.tanh %357 : vector<2x32xf32>
    %359 = vector.extract_strided_slice %344 {offsets = [0, 96], sizes = [2, 32], strides = [1, 1]} : vector<2x128xf32> to vector<2x32xf32>
    %360 = arith.negf %359 : vector<2x32xf32>
    %361 = math.exp %360 : vector<2x32xf32>
    %cst_91 = arith.constant 1.000000e+00 : f32
    %362 = vector.broadcast %cst_91 : f32 to vector<2x32xf32>
    %363 = arith.addf %362, %361 : vector<2x32xf32>
    %364 = arith.divf %362, %363 : vector<2x32xf32>
    %365 = arith.mulf %356, %325 : vector<2x32xf32>
    %366 = arith.mulf %350, %358 : vector<2x32xf32>
    %367 = arith.addf %365, %366 : vector<2x32xf32>
    %368 = math.tanh %367 : vector<2x32xf32>
    %369 = arith.mulf %364, %368 : vector<2x32xf32>
    %370 = vector.extract_strided_slice %369 {offsets = [0, 0], sizes = [1, 32], strides = [1, 1]} : vector<2x32xf32> to vector<1x32xf32>
    %c7_92 = arith.constant 7 : index
    %c0_93 = arith.constant 0 : index
    %371 = vector.load %arg12[%c7_92, %c0_93] : memref<8x32xf32, #tpu.memory_space<vmem>>, vector<1x32xf32>
    tpu.vector_store %arg12[%c7_92, %c0_93], %370 {strides = array<i32>} : memref<8x32xf32, #tpu.memory_space<vmem>>, vector<1x32xf32>,
    %372 = vector.extract_strided_slice %369 {offsets = [1, 0], sizes = [1, 32], strides = [1, 1]} : vector<2x32xf32> to vector<1x32xf32>
    %c0_94 = arith.constant 0 : index
    %c0_95 = arith.constant 0 : index
    %373 = vector.load %arg13[%c0_94, %c0_95] : memref<8x32xf32, #tpu.memory_space<vmem>>, vector<1x32xf32>
    tpu.vector_store %arg13[%c0_94, %c0_95], %372 {strides = array<i32>} : memref<8x32xf32, #tpu.memory_space<vmem>>, vector<1x32xf32>,
    %c0_96 = arith.constant 0 : index
    %c0_97 = arith.constant 0 : index
    %374 = vector.load %arg12[%c0_96, %c0_97] : memref<8x32xf32, #tpu.memory_space<vmem>>, vector<8x32xf32>
    %c0_98 = arith.constant 0 : index
    %c0_99 = arith.constant 0 : index
    %375 = vector.load %arg5[%c0_98, %c0_99] : memref<32x8xf32, #tpu.memory_space<vmem>>, vector<32x8xf32>
    %cst_100 = arith.constant dense<0.000000e+00> : vector<8x8xf32>
    %376 = tpu.matmul %374, %375, %cst_100 {dimension_numbers = #tpu.dot_dimension_numbers<[1], [0], [0], [1], [0, 0, 1, 1], [], []>} : vector<8x32xf32>, vector<32x8xf32>, vector<8x8xf32> -> vector<8x8xf32>
    %c0_101 = arith.constant 0 : index
    %c0_102 = arith.constant 0 : index
    %377 = vector.load %arg13[%c0_101, %c0_102] : memref<8x32xf32, #tpu.memory_space<vmem>>, vector<8x32xf32>
    %c0_103 = arith.constant 0 : index
    %c0_104 = arith.constant 0 : index
    %378 = vector.load %arg6[%c0_103, %c0_104] : memref<32x8xf32, #tpu.memory_space<vmem>>, vector<32x8xf32>
    %cst_105 = arith.constant dense<0.000000e+00> : vector<8x8xf32>
    %379 = tpu.matmul %377, %378, %cst_105 {dimension_numbers = #tpu.dot_dimension_numbers<[1], [0], [0], [1], [0, 0, 1, 1], [], []>} : vector<8x32xf32>, vector<32x8xf32>, vector<8x8xf32> -> vector<8x8xf32>
    %380 = arith.addf %376, %379 : vector<8x8xf32>
    %c0_106 = arith.constant 0 : index
    %c0_107 = arith.constant 0 : index
    %381 = vector.load %arg7[%c0_106, %c0_107] : memref<1x8xf32, #tpu.memory_space<vmem>>, vector<1x8xf32>
    %382 = vector.broadcast %381 : vector<1x8xf32> to vector<8x8xf32>
    %383 = arith.addf %380, %382 : vector<8x8xf32>
    %c0_108 = arith.constant 0 : index
    %c0_109 = arith.constant 0 : index
    %384 = vector.load %arg8[%c0_108, %c0_109] : memref<8x8xf32, #tpu.memory_space<vmem>>, vector<8x8xf32>
    %385 = tpu.iota {dimensions = array<i32: 0>} : vector<8x8xi32>
    %386 = tpu.iota {dimensions = array<i32: 1>} : vector<8x8xi32>
    %387 = arith.cmpi eq, %385, %386 : vector<8x8xi32>
    %388 = vector.extract_strided_slice %383 {offsets = [0, 0], sizes = [1, 8], strides = [1, 1]} : vector<8x8xf32> to vector<1x8xf32>
    %389 = vector.extract_strided_slice %384 {offsets = [6, 0], sizes = [1, 8], strides = [1, 1]} : vector<8x8xf32> to vector<1x8xf32>
    %390 = arith.addf %388, %389 : vector<1x8xf32>
    %cst_110 = arith.constant 0.000000e+00 : f32
    %391 = vector.shape_cast %390 : vector<1x8xf32> to vector<1x8xf32>
    %392 = vector.broadcast %391 : vector<1x8xf32> to vector<8x8xf32>
    %393 = vector.broadcast %cst_110 : f32 to vector<8x8xf32>
    %394 = arith.select %387, %392, %393 : vector<8x8xi1>, vector<8x8xf32>
    %cst_111 = arith.constant dense<0.000000e+00> : vector<8xf32>
    %395 = vector.multi_reduction <add>, %394, %cst_111 [1] : vector<8x8xf32> to vector<8xf32>
    %396 = vector.shape_cast %395 : vector<8xf32> to vector<8x1xf32>
    %397 = tpu.iota {dimensions = array<i32: 0>} : vector<8x8xi32>
    %398 = vector.broadcast %396 : vector<8x1xf32> to vector<8x8xf32>
    %399 = arith.addf %384, %398 : vector<8x8xf32>
    %cst_112 = arith.constant dense<0xFF800000> : vector<8xf32>
    %400 = vector.multi_reduction <maximumf>, %399, %cst_112 [0] : vector<8x8xf32> to vector<8xf32>
    %401 = vector.shape_cast %400 : vector<8xf32> to vector<1x8xf32>
    %402 = vector.broadcast %401 : vector<1x8xf32> to vector<8x8xf32>
    %403 = arith.cmpf oge, %399, %402 : vector<8x8xf32>
    %c8_i32 = arith.constant 8 : i32
    %404 = vector.broadcast %c8_i32 : i32 to vector<8x8xi32>
    %405 = arith.select %403, %397, %404 : vector<8x8xi1>, vector<8x8xi32>
    %cst_113 = arith.constant dense<2147483647> : vector<8xi32>
    %406 = vector.multi_reduction <minsi>, %405, %cst_113 [0] : vector<8x8xi32> to vector<8xi32>
    %407 = vector.shape_cast %406 : vector<8xi32> to vector<1x8xi32>
    %408 = vector.extract_strided_slice %383 {offsets = [1, 0], sizes = [1, 8], strides = [1, 1]} : vector<8x8xf32> to vector<1x8xf32>
    %409 = arith.addf %401, %408 : vector<1x8xf32>
    %cst_114 = arith.constant 0.000000e+00 : f32
    %410 = vector.shape_cast %409 : vector<1x8xf32> to vector<1x8xf32>
    %411 = vector.broadcast %410 : vector<1x8xf32> to vector<8x8xf32>
    %412 = vector.broadcast %cst_114 : f32 to vector<8x8xf32>
    %413 = arith.select %387, %411, %412 : vector<8x8xi1>, vector<8x8xf32>
    %cst_115 = arith.constant dense<0.000000e+00> : vector<8xf32>
    %414 = vector.multi_reduction <add>, %413, %cst_115 [1] : vector<8x8xf32> to vector<8xf32>
    %415 = vector.shape_cast %414 : vector<8xf32> to vector<8x1xf32>
    %416 = vector.broadcast %415 : vector<8x1xf32> to vector<8x8xf32>
    %417 = arith.addf %384, %416 : vector<8x8xf32>
    %cst_116 = arith.constant dense<0xFF800000> : vector<8xf32>
    %418 = vector.multi_reduction <maximumf>, %417, %cst_116 [0] : vector<8x8xf32> to vector<8xf32>
    %419 = vector.shape_cast %418 : vector<8xf32> to vector<1x8xf32>
    %420 = vector.broadcast %419 : vector<1x8xf32> to vector<8x8xf32>
    %421 = arith.cmpf oge, %417, %420 : vector<8x8xf32>
    %c8_i32_117 = arith.constant 8 : i32
    %422 = vector.broadcast %c8_i32_117 : i32 to vector<8x8xi32>
    %423 = arith.select %421, %397, %422 : vector<8x8xi1>, vector<8x8xi32>
    %cst_118 = arith.constant dense<2147483647> : vector<8xi32>
    %424 = vector.multi_reduction <minsi>, %423, %cst_118 [0] : vector<8x8xi32> to vector<8xi32>
    %425 = vector.shape_cast %424 : vector<8xi32> to vector<1x8xi32>
    %426 = vector.extract_strided_slice %383 {offsets = [2, 0], sizes = [1, 8], strides = [1, 1]} : vector<8x8xf32> to vector<1x8xf32>
    %427 = arith.addf %419, %426 : vector<1x8xf32>
    %cst_119 = arith.constant 0.000000e+00 : f32
    %428 = vector.shape_cast %427 : vector<1x8xf32> to vector<1x8xf32>
    %429 = vector.broadcast %428 : vector<1x8xf32> to vector<8x8xf32>
    %430 = vector.broadcast %cst_119 : f32 to vector<8x8xf32>
    %431 = arith.select %387, %429, %430 : vector<8x8xi1>, vector<8x8xf32>
    %cst_120 = arith.constant dense<0.000000e+00> : vector<8xf32>
    %432 = vector.multi_reduction <add>, %431, %cst_120 [1] : vector<8x8xf32> to vector<8xf32>
    %433 = vector.shape_cast %432 : vector<8xf32> to vector<8x1xf32>
    %434 = vector.broadcast %433 : vector<8x1xf32> to vector<8x8xf32>
    %435 = arith.addf %384, %434 : vector<8x8xf32>
    %cst_121 = arith.constant dense<0xFF800000> : vector<8xf32>
    %436 = vector.multi_reduction <maximumf>, %435, %cst_121 [0] : vector<8x8xf32> to vector<8xf32>
    %437 = vector.shape_cast %436 : vector<8xf32> to vector<1x8xf32>
    %438 = vector.broadcast %437 : vector<1x8xf32> to vector<8x8xf32>
    %439 = arith.cmpf oge, %435, %438 : vector<8x8xf32>
    %c8_i32_122 = arith.constant 8 : i32
    %440 = vector.broadcast %c8_i32_122 : i32 to vector<8x8xi32>
    %441 = arith.select %439, %397, %440 : vector<8x8xi1>, vector<8x8xi32>
    %cst_123 = arith.constant dense<2147483647> : vector<8xi32>
    %442 = vector.multi_reduction <minsi>, %441, %cst_123 [0] : vector<8x8xi32> to vector<8xi32>
    %443 = vector.shape_cast %442 : vector<8xi32> to vector<1x8xi32>
    %444 = vector.extract_strided_slice %383 {offsets = [3, 0], sizes = [1, 8], strides = [1, 1]} : vector<8x8xf32> to vector<1x8xf32>
    %445 = arith.addf %437, %444 : vector<1x8xf32>
    %cst_124 = arith.constant 0.000000e+00 : f32
    %446 = vector.shape_cast %445 : vector<1x8xf32> to vector<1x8xf32>
    %447 = vector.broadcast %446 : vector<1x8xf32> to vector<8x8xf32>
    %448 = vector.broadcast %cst_124 : f32 to vector<8x8xf32>
    %449 = arith.select %387, %447, %448 : vector<8x8xi1>, vector<8x8xf32>
    %cst_125 = arith.constant dense<0.000000e+00> : vector<8xf32>
    %450 = vector.multi_reduction <add>, %449, %cst_125 [1] : vector<8x8xf32> to vector<8xf32>
    %451 = vector.shape_cast %450 : vector<8xf32> to vector<8x1xf32>
    %452 = vector.broadcast %451 : vector<8x1xf32> to vector<8x8xf32>
    %453 = arith.addf %384, %452 : vector<8x8xf32>
    %cst_126 = arith.constant dense<0xFF800000> : vector<8xf32>
    %454 = vector.multi_reduction <maximumf>, %453, %cst_126 [0] : vector<8x8xf32> to vector<8xf32>
    %455 = vector.shape_cast %454 : vector<8xf32> to vector<1x8xf32>
    %456 = vector.broadcast %455 : vector<1x8xf32> to vector<8x8xf32>
    %457 = arith.cmpf oge, %453, %456 : vector<8x8xf32>
    %c8_i32_127 = arith.constant 8 : i32
    %458 = vector.broadcast %c8_i32_127 : i32 to vector<8x8xi32>
    %459 = arith.select %457, %397, %458 : vector<8x8xi1>, vector<8x8xi32>
    %cst_128 = arith.constant dense<2147483647> : vector<8xi32>
    %460 = vector.multi_reduction <minsi>, %459, %cst_128 [0] : vector<8x8xi32> to vector<8xi32>
    %461 = vector.shape_cast %460 : vector<8xi32> to vector<1x8xi32>
    %462 = vector.extract_strided_slice %383 {offsets = [4, 0], sizes = [1, 8], strides = [1, 1]} : vector<8x8xf32> to vector<1x8xf32>
    %463 = arith.addf %455, %462 : vector<1x8xf32>
    %cst_129 = arith.constant 0.000000e+00 : f32
    %464 = vector.shape_cast %463 : vector<1x8xf32> to vector<1x8xf32>
    %465 = vector.broadcast %464 : vector<1x8xf32> to vector<8x8xf32>
    %466 = vector.broadcast %cst_129 : f32 to vector<8x8xf32>
    %467 = arith.select %387, %465, %466 : vector<8x8xi1>, vector<8x8xf32>
    %cst_130 = arith.constant dense<0.000000e+00> : vector<8xf32>
    %468 = vector.multi_reduction <add>, %467, %cst_130 [1] : vector<8x8xf32> to vector<8xf32>
    %469 = vector.shape_cast %468 : vector<8xf32> to vector<8x1xf32>
    %470 = vector.broadcast %469 : vector<8x1xf32> to vector<8x8xf32>
    %471 = arith.addf %384, %470 : vector<8x8xf32>
    %cst_131 = arith.constant dense<0xFF800000> : vector<8xf32>
    %472 = vector.multi_reduction <maximumf>, %471, %cst_131 [0] : vector<8x8xf32> to vector<8xf32>
    %473 = vector.shape_cast %472 : vector<8xf32> to vector<1x8xf32>
    %474 = vector.broadcast %473 : vector<1x8xf32> to vector<8x8xf32>
    %475 = arith.cmpf oge, %471, %474 : vector<8x8xf32>
    %c8_i32_132 = arith.constant 8 : i32
    %476 = vector.broadcast %c8_i32_132 : i32 to vector<8x8xi32>
    %477 = arith.select %475, %397, %476 : vector<8x8xi1>, vector<8x8xi32>
    %cst_133 = arith.constant dense<2147483647> : vector<8xi32>
    %478 = vector.multi_reduction <minsi>, %477, %cst_133 [0] : vector<8x8xi32> to vector<8xi32>
    %479 = vector.shape_cast %478 : vector<8xi32> to vector<1x8xi32>
    %480 = vector.extract_strided_slice %383 {offsets = [5, 0], sizes = [1, 8], strides = [1, 1]} : vector<8x8xf32> to vector<1x8xf32>
    %481 = arith.addf %473, %480 : vector<1x8xf32>
    %cst_134 = arith.constant 0.000000e+00 : f32
    %482 = vector.shape_cast %481 : vector<1x8xf32> to vector<1x8xf32>
    %483 = vector.broadcast %482 : vector<1x8xf32> to vector<8x8xf32>
    %484 = vector.broadcast %cst_134 : f32 to vector<8x8xf32>
    %485 = arith.select %387, %483, %484 : vector<8x8xi1>, vector<8x8xf32>
    %cst_135 = arith.constant dense<0.000000e+00> : vector<8xf32>
    %486 = vector.multi_reduction <add>, %485, %cst_135 [1] : vector<8x8xf32> to vector<8xf32>
    %487 = vector.shape_cast %486 : vector<8xf32> to vector<8x1xf32>
    %488 = vector.broadcast %487 : vector<8x1xf32> to vector<8x8xf32>
    %489 = arith.addf %384, %488 : vector<8x8xf32>
    %cst_136 = arith.constant dense<0xFF800000> : vector<8xf32>
    %490 = vector.multi_reduction <maximumf>, %489, %cst_136 [0] : vector<8x8xf32> to vector<8xf32>
    %491 = vector.shape_cast %490 : vector<8xf32> to vector<1x8xf32>
    %492 = vector.broadcast %491 : vector<1x8xf32> to vector<8x8xf32>
    %493 = arith.cmpf oge, %489, %492 : vector<8x8xf32>
    %c8_i32_137 = arith.constant 8 : i32
    %494 = vector.broadcast %c8_i32_137 : i32 to vector<8x8xi32>
    %495 = arith.select %493, %397, %494 : vector<8x8xi1>, vector<8x8xi32>
    %cst_138 = arith.constant dense<2147483647> : vector<8xi32>
    %496 = vector.multi_reduction <minsi>, %495, %cst_138 [0] : vector<8x8xi32> to vector<8xi32>
    %497 = vector.shape_cast %496 : vector<8xi32> to vector<1x8xi32>
    %498 = vector.extract_strided_slice %383 {offsets = [6, 0], sizes = [1, 8], strides = [1, 1]} : vector<8x8xf32> to vector<1x8xf32>
    %499 = arith.addf %491, %498 : vector<1x8xf32>
    %cst_139 = arith.constant 0.000000e+00 : f32
    %500 = vector.shape_cast %499 : vector<1x8xf32> to vector<1x8xf32>
    %501 = vector.broadcast %500 : vector<1x8xf32> to vector<8x8xf32>
    %502 = vector.broadcast %cst_139 : f32 to vector<8x8xf32>
    %503 = arith.select %387, %501, %502 : vector<8x8xi1>, vector<8x8xf32>
    %cst_140 = arith.constant dense<0.000000e+00> : vector<8xf32>
    %504 = vector.multi_reduction <add>, %503, %cst_140 [1] : vector<8x8xf32> to vector<8xf32>
    %505 = vector.shape_cast %504 : vector<8xf32> to vector<8x1xf32>
    %506 = vector.broadcast %505 : vector<8x1xf32> to vector<8x8xf32>
    %507 = arith.addf %384, %506 : vector<8x8xf32>
    %cst_141 = arith.constant dense<0xFF800000> : vector<8xf32>
    %508 = vector.multi_reduction <maximumf>, %507, %cst_141 [0] : vector<8x8xf32> to vector<8xf32>
    %509 = vector.shape_cast %508 : vector<8xf32> to vector<1x8xf32>
    %510 = vector.broadcast %509 : vector<1x8xf32> to vector<8x8xf32>
    %511 = arith.cmpf oge, %507, %510 : vector<8x8xf32>
    %c8_i32_142 = arith.constant 8 : i32
    %512 = vector.broadcast %c8_i32_142 : i32 to vector<8x8xi32>
    %513 = arith.select %511, %397, %512 : vector<8x8xi1>, vector<8x8xi32>
    %cst_143 = arith.constant dense<2147483647> : vector<8xi32>
    %514 = vector.multi_reduction <minsi>, %513, %cst_143 [0] : vector<8x8xi32> to vector<8xi32>
    %515 = vector.shape_cast %514 : vector<8xi32> to vector<1x8xi32>
    %516 = vector.extract_strided_slice %383 {offsets = [7, 0], sizes = [1, 8], strides = [1, 1]} : vector<8x8xf32> to vector<1x8xf32>
    %517 = arith.addf %509, %516 : vector<1x8xf32>
    %cst_144 = arith.constant 0.000000e+00 : f32
    %518 = vector.shape_cast %517 : vector<1x8xf32> to vector<1x8xf32>
    %519 = vector.broadcast %518 : vector<1x8xf32> to vector<8x8xf32>
    %520 = vector.broadcast %cst_144 : f32 to vector<8x8xf32>
    %521 = arith.select %387, %519, %520 : vector<8x8xi1>, vector<8x8xf32>
    %cst_145 = arith.constant dense<0.000000e+00> : vector<8xf32>
    %522 = vector.multi_reduction <add>, %521, %cst_145 [1] : vector<8x8xf32> to vector<8xf32>
    %523 = vector.shape_cast %522 : vector<8xf32> to vector<8x1xf32>
    %524 = vector.extract_strided_slice %384 {offsets = [0, 7], sizes = [8, 1], strides = [1, 1]} : vector<8x8xf32> to vector<8x1xf32>
    %525 = arith.addf %523, %524 : vector<8x1xf32>
    %cst_146 = arith.constant dense<0xFF800000> : vector<1xf32>
    %526 = vector.multi_reduction <maximumf>, %525, %cst_146 [0] : vector<8x1xf32> to vector<1xf32>
    %527 = vector.shape_cast %526 : vector<1xf32> to vector<1x1xf32>
    %528 = tpu.iota {dimensions = array<i32: 0>} : vector<8x1xi32>
    %529 = vector.broadcast %527 : vector<1x1xf32> to vector<8x1xf32>
    %530 = arith.cmpf oge, %525, %529 : vector<8x1xf32>
    %c8_i32_147 = arith.constant 8 : i32
    %531 = vector.broadcast %c8_i32_147 : i32 to vector<8x1xi32>
    %532 = arith.select %530, %528, %531 : vector<8x1xi1>, vector<8x1xi32>
    %cst_148 = arith.constant dense<2147483647> : vector<1xi32>
    %533 = vector.multi_reduction <minsi>, %532, %cst_148 [0] : vector<8x1xi32> to vector<1xi32>
    %534 = vector.shape_cast %533 : vector<1xi32> to vector<1x1xi32>
    %535 = tpu.iota {dimensions = array<i32: 1>} : vector<1x8xi32>
    %536 = tpu.iota {dimensions = array<i32: 1>} : vector<1x8xi32>
    %c7_i32 = arith.constant 7 : i32
    %537 = vector.broadcast %c7_i32 : i32 to vector<1x8xi32>
    %538 = arith.cmpi eq, %535, %537 : vector<1x8xi32>
    %c0_i32_149 = arith.constant 0 : i32
    %539 = vector.shape_cast %534 : vector<1x1xi32> to vector<1x1xi32>
    %540 = vector.broadcast %539 : vector<1x1xi32> to vector<1x8xi32>
    %541 = vector.broadcast %c0_i32_149 : i32 to vector<1x8xi32>
    %542 = arith.select %538, %540, %541 : vector<1x8xi1>, vector<1x8xi32>
    %543 = vector.broadcast %534 : vector<1x1xi32> to vector<1x8xi32>
    %544 = arith.cmpi eq, %536, %543 : vector<1x8xi32>
    %c0_i32_150 = arith.constant 0 : i32
    %545 = vector.broadcast %c0_i32_150 : i32 to vector<1x8xi32>
    %546 = arith.select %544, %515, %545 : vector<1x8xi1>, vector<1x8xi32>
    %cst_151 = arith.constant dense<0> : vector<1xi32>
    %547 = vector.multi_reduction <add>, %546, %cst_151 [1] : vector<1x8xi32> to vector<1xi32>
    %548 = vector.shape_cast %547 : vector<1xi32> to vector<1x1xi32>
    %c6_i32 = arith.constant 6 : i32
    %549 = vector.broadcast %c6_i32 : i32 to vector<1x8xi32>
    %550 = arith.cmpi eq, %535, %549 : vector<1x8xi32>
    %c0_i32_152 = arith.constant 0 : i32
    %551 = vector.shape_cast %548 : vector<1x1xi32> to vector<1x1xi32>
    %552 = vector.broadcast %551 : vector<1x1xi32> to vector<1x8xi32>
    %553 = vector.broadcast %c0_i32_152 : i32 to vector<1x8xi32>
    %554 = arith.select %550, %552, %553 : vector<1x8xi1>, vector<1x8xi32>
    %555 = arith.addi %542, %554 : vector<1x8xi32>
    %556 = vector.broadcast %548 : vector<1x1xi32> to vector<1x8xi32>
    %557 = arith.cmpi eq, %536, %556 : vector<1x8xi32>
    %c0_i32_153 = arith.constant 0 : i32
    %558 = vector.broadcast %c0_i32_153 : i32 to vector<1x8xi32>
    %559 = arith.select %557, %497, %558 : vector<1x8xi1>, vector<1x8xi32>
    %cst_154 = arith.constant dense<0> : vector<1xi32>
    %560 = vector.multi_reduction <add>, %559, %cst_154 [1] : vector<1x8xi32> to vector<1xi32>
    %561 = vector.shape_cast %560 : vector<1xi32> to vector<1x1xi32>
    %c5_i32 = arith.constant 5 : i32
    %562 = vector.broadcast %c5_i32 : i32 to vector<1x8xi32>
    %563 = arith.cmpi eq, %535, %562 : vector<1x8xi32>
    %c0_i32_155 = arith.constant 0 : i32
    %564 = vector.shape_cast %561 : vector<1x1xi32> to vector<1x1xi32>
    %565 = vector.broadcast %564 : vector<1x1xi32> to vector<1x8xi32>
    %566 = vector.broadcast %c0_i32_155 : i32 to vector<1x8xi32>
    %567 = arith.select %563, %565, %566 : vector<1x8xi1>, vector<1x8xi32>
    %568 = arith.addi %555, %567 : vector<1x8xi32>
    %569 = vector.broadcast %561 : vector<1x1xi32> to vector<1x8xi32>
    %570 = arith.cmpi eq, %536, %569 : vector<1x8xi32>
    %c0_i32_156 = arith.constant 0 : i32
    %571 = vector.broadcast %c0_i32_156 : i32 to vector<1x8xi32>
    %572 = arith.select %570, %479, %571 : vector<1x8xi1>, vector<1x8xi32>
    %cst_157 = arith.constant dense<0> : vector<1xi32>
    %573 = vector.multi_reduction <add>, %572, %cst_157 [1] : vector<1x8xi32> to vector<1xi32>
    %574 = vector.shape_cast %573 : vector<1xi32> to vector<1x1xi32>
    %c4_i32 = arith.constant 4 : i32
    %575 = vector.broadcast %c4_i32 : i32 to vector<1x8xi32>
    %576 = arith.cmpi eq, %535, %575 : vector<1x8xi32>
    %c0_i32_158 = arith.constant 0 : i32
    %577 = vector.shape_cast %574 : vector<1x1xi32> to vector<1x1xi32>
    %578 = vector.broadcast %577 : vector<1x1xi32> to vector<1x8xi32>
    %579 = vector.broadcast %c0_i32_158 : i32 to vector<1x8xi32>
    %580 = arith.select %576, %578, %579 : vector<1x8xi1>, vector<1x8xi32>
    %581 = arith.addi %568, %580 : vector<1x8xi32>
    %582 = vector.broadcast %574 : vector<1x1xi32> to vector<1x8xi32>
    %583 = arith.cmpi eq, %536, %582 : vector<1x8xi32>
    %c0_i32_159 = arith.constant 0 : i32
    %584 = vector.broadcast %c0_i32_159 : i32 to vector<1x8xi32>
    %585 = arith.select %583, %461, %584 : vector<1x8xi1>, vector<1x8xi32>
    %cst_160 = arith.constant dense<0> : vector<1xi32>
    %586 = vector.multi_reduction <add>, %585, %cst_160 [1] : vector<1x8xi32> to vector<1xi32>
    %587 = vector.shape_cast %586 : vector<1xi32> to vector<1x1xi32>
    %c3_i32 = arith.constant 3 : i32
    %588 = vector.broadcast %c3_i32 : i32 to vector<1x8xi32>
    %589 = arith.cmpi eq, %535, %588 : vector<1x8xi32>
    %c0_i32_161 = arith.constant 0 : i32
    %590 = vector.shape_cast %587 : vector<1x1xi32> to vector<1x1xi32>
    %591 = vector.broadcast %590 : vector<1x1xi32> to vector<1x8xi32>
    %592 = vector.broadcast %c0_i32_161 : i32 to vector<1x8xi32>
    %593 = arith.select %589, %591, %592 : vector<1x8xi1>, vector<1x8xi32>
    %594 = arith.addi %581, %593 : vector<1x8xi32>
    %595 = vector.broadcast %587 : vector<1x1xi32> to vector<1x8xi32>
    %596 = arith.cmpi eq, %536, %595 : vector<1x8xi32>
    %c0_i32_162 = arith.constant 0 : i32
    %597 = vector.broadcast %c0_i32_162 : i32 to vector<1x8xi32>
    %598 = arith.select %596, %443, %597 : vector<1x8xi1>, vector<1x8xi32>
    %cst_163 = arith.constant dense<0> : vector<1xi32>
    %599 = vector.multi_reduction <add>, %598, %cst_163 [1] : vector<1x8xi32> to vector<1xi32>
    %600 = vector.shape_cast %599 : vector<1xi32> to vector<1x1xi32>
    %c2_i32 = arith.constant 2 : i32
    %601 = vector.broadcast %c2_i32 : i32 to vector<1x8xi32>
    %602 = arith.cmpi eq, %535, %601 : vector<1x8xi32>
    %c0_i32_164 = arith.constant 0 : i32
    %603 = vector.shape_cast %600 : vector<1x1xi32> to vector<1x1xi32>
    %604 = vector.broadcast %603 : vector<1x1xi32> to vector<1x8xi32>
    %605 = vector.broadcast %c0_i32_164 : i32 to vector<1x8xi32>
    %606 = arith.select %602, %604, %605 : vector<1x8xi1>, vector<1x8xi32>
    %607 = arith.addi %594, %606 : vector<1x8xi32>
    %608 = vector.broadcast %600 : vector<1x1xi32> to vector<1x8xi32>
    %609 = arith.cmpi eq, %536, %608 : vector<1x8xi32>
    %c0_i32_165 = arith.constant 0 : i32
    %610 = vector.broadcast %c0_i32_165 : i32 to vector<1x8xi32>
    %611 = arith.select %609, %425, %610 : vector<1x8xi1>, vector<1x8xi32>
    %cst_166 = arith.constant dense<0> : vector<1xi32>
    %612 = vector.multi_reduction <add>, %611, %cst_166 [1] : vector<1x8xi32> to vector<1xi32>
    %613 = vector.shape_cast %612 : vector<1xi32> to vector<1x1xi32>
    %c1_i32 = arith.constant 1 : i32
    %614 = vector.broadcast %c1_i32 : i32 to vector<1x8xi32>
    %615 = arith.cmpi eq, %535, %614 : vector<1x8xi32>
    %c0_i32_167 = arith.constant 0 : i32
    %616 = vector.shape_cast %613 : vector<1x1xi32> to vector<1x1xi32>
    %617 = vector.broadcast %616 : vector<1x1xi32> to vector<1x8xi32>
    %618 = vector.broadcast %c0_i32_167 : i32 to vector<1x8xi32>
    %619 = arith.select %615, %617, %618 : vector<1x8xi1>, vector<1x8xi32>
    %620 = arith.addi %607, %619 : vector<1x8xi32>
    %621 = vector.broadcast %613 : vector<1x1xi32> to vector<1x8xi32>
    %622 = arith.cmpi eq, %536, %621 : vector<1x8xi32>
    %c0_i32_168 = arith.constant 0 : i32
    %623 = vector.broadcast %c0_i32_168 : i32 to vector<1x8xi32>
    %624 = arith.select %622, %407, %623 : vector<1x8xi1>, vector<1x8xi32>
    %cst_169 = arith.constant dense<0> : vector<1xi32>
    %625 = vector.multi_reduction <add>, %624, %cst_169 [1] : vector<1x8xi32> to vector<1xi32>
    %626 = vector.shape_cast %625 : vector<1xi32> to vector<1x1xi32>
    %c0_i32_170 = arith.constant 0 : i32
    %627 = vector.broadcast %c0_i32_170 : i32 to vector<1x8xi32>
    %628 = arith.cmpi eq, %535, %627 : vector<1x8xi32>
    %c0_i32_171 = arith.constant 0 : i32
    %629 = vector.shape_cast %626 : vector<1x1xi32> to vector<1x1xi32>
    %630 = vector.broadcast %629 : vector<1x1xi32> to vector<1x8xi32>
    %631 = vector.broadcast %c0_i32_171 : i32 to vector<1x8xi32>
    %632 = arith.select %628, %630, %631 : vector<1x8xi1>, vector<1x8xi32>
    %633 = arith.addi %620, %632 : vector<1x8xi32>
    %c0_172 = arith.constant 0 : index
    %c0_173 = arith.constant 0 : index
    %634 = vector.load %arg9[%c0_172, %c0_173] : memref<1x1xf32, #tpu.memory_space<vmem>>, vector<1x1xf32>
    tpu.vector_store %arg9[%c0_172, %c0_173], %527 {strides = array<i32>} : memref<1x1xf32, #tpu.memory_space<vmem>>, vector<1x1xf32>,
    %c0_174 = arith.constant 0 : index
    %c0_175 = arith.constant 0 : index
    %635 = vector.load %arg10[%c0_174, %c0_175] : memref<1x8xi32, #tpu.memory_space<vmem>>, vector<1x8xi32>
    tpu.vector_store %arg10[%c0_174, %c0_175], %633 {strides = array<i32>} : memref<1x8xi32, #tpu.memory_space<vmem>>, vector<1x8xi32>,
    return
  }
}

</mosaic_0001>

<llo_original>
// kernel: lstm_tagger_forward.1
$region0: #{lstm_tagger_forward.1}
  #allocation0 [shape = 'u32[]', space=smem, size = 0x4, offset = 0x4, fixed_abs, tag = 'smem constant byte address 0x4 - core index']
  #allocation1 [shape = 'u32[144,128]{1,0:T(1,128)}', space=vmem, size = 0x12000, scoped, tag = 'internal scratch']
  #allocation2 [shape = 'f32[8,32]{1,0:T(8,128)}', space=vmem, size = 0x1000, scoped, tag = 'scratch operand']
  #allocation3 [shape = 'f32[8,32]{1,0:T(8,128)}', space=vmem, size = 0x1000, scoped, tag = 'scratch operand']
  #allocation4 [shape = 'f32[8,32]{1,0:T(8,128)}', space=vmem, size = 0x1000, scoped, tag = 'scratch operand']
  %s0 = inlined_call_operand.vmem [shape: s32[8], index: 0, kind: input, shape index: {}]
  %s1 = inlined_call_operand.vmem [shape: f32[50,32], index: 1, kind: input, shape index: {}]
  %s2 = inlined_call_operand.vmem [shape: bf16[32,256], index: 2, kind: input, shape index: {}]
  %s3 = inlined_call_operand.vmem [shape: bf16[32,256], index: 3, kind: input, shape index: {}]
  %s4 = inlined_call_operand.vmem [shape: f32[1,256], index: 4, kind: input, shape index: {}]
  %s5 = inlined_call_operand.vmem [shape: f32[32,8], index: 5, kind: input, shape index: {}]
  %s6 = inlined_call_operand.vmem [shape: f32[32,8], index: 6, kind: input, shape index: {}]
  %s7 = inlined_call_operand.vmem [shape: f32[1,8], index: 7, kind: input, shape index: {}]
  %s8 = inlined_call_operand.vmem [shape: f32[8,8], index: 8, kind: input, shape index: {}]
  %s9 = inlined_call_operand.hbm [shape: f32[1,1], index: 9, kind: output, shape index: {0}]
  %s10 = inlined_call_operand.hbm [shape: s32[1,8], index: 10, kind: output, shape index: {1}]
  %11 = xla_tuple %s9, %s10
  %s12 = sld [smem:[#allocation0]]
  $region58: #{lstm_tagger_forward.1} parent=0
    _
  %s14 = ssub.s32 1, %s12
  %s15 = scalar_select 0, %s14, %s12
  $region1: #{lstm_tagger_forward.1} parent=0
    #allocation5 [shape = 'u8[512]{0}', space=smem, size = 0x200, scoped, tag = 'input window, operand 0, single buffered']
    #allocation6 [shape = 's32[1]{0}', space=sflag, size = 0x4, scoped, tag = 'scoped memory for lstm_tagger_forward.1']
    #allocation7 [shape = 's32[1]{0}', space=sflag, size = 0x4, scoped, tag = 'scoped memory for lstm_tagger_forward.1']
    #allocation8 [shape = 'u8[512]{0}', space=vmem, size = 0x400, scoped, tag = 'output window, operand 0, single buffered']
    #allocation9 [shape = 'u8[512]{0}', space=vmem, size = 0x400, scoped, tag = 'output window, operand 1, single buffered']
    #allocation10 [shape = 's32[1]{0}', space=sflag, size = 0x4, scoped, tag = 'scoped memory for lstm_tagger_forward.1']
    %16 = vsyncpa [#allocation7], 0
    %17 = vsyncpa [#allocation6], 0
    %18 = vsyncpa [#allocation10], 0
    // Predicated region
    $region2: #{lstm_tagger_forward.1} parent=1 // pred_check
      _
    $region3: #{lstm_tagger_forward.1} parent=1 // pred_check_branch
      %20 = sbr.rel (0) target = $region5
    $region4: #{lstm_tagger_forward.1} parent=1 // pred_region
      %s22 = ssub.s32 16, 16
      %23 = vsyncadd [#allocation7], %s22
      %s25 = sshll.u32 %s0, 4
      %s26 = int_to_ptr.vmem [resolvable:$true] %s25
      %28 = dma.vmem_to_smem %s26, 16, [#allocation5], [#allocation7]
    $region5: #{lstm_tagger_forward.1} parent=1 // pred_fallthru
      _
    // Predicated region
    $region6: #{lstm_tagger_forward.1} parent=1 // pred_check
      _
    $region7: #{lstm_tagger_forward.1} parent=1 // pred_check_branch
      %30 = sbr.rel (0) target = $region9
    $region8: #{lstm_tagger_forward.1} parent=1 // pred_region
      _
    $region9: #{lstm_tagger_forward.1} parent=1 // pred_fallthru
      _
    // Predicated region
    $region10: #{lstm_tagger_forward.1} parent=1 // pred_check
      _
    $region11: #{lstm_tagger_forward.1} parent=1 // pred_check_branch
      %32 = sbr.rel (0) target = $region13
    $region12: #{lstm_tagger_forward.1} parent=1 // pred_region
      _
    $region13: #{lstm_tagger_forward.1} parent=1 // pred_fallthru
      _
    // Predicated region
    $region14: #{lstm_tagger_forward.1} parent=1 // pred_check
      _
    $region15: #{lstm_tagger_forward.1} parent=1 // pred_check_branch
      %34 = sbr.rel (0) target = $region17
    $region16: #{lstm_tagger_forward.1} parent=1 // pred_region
      _
    $region17: #{lstm_tagger_forward.1} parent=1 // pred_fallthru
      _
    // Predicated region
    $region18: #{lstm_tagger_forward.1} parent=1 // pred_check
      _
    $region19: #{lstm_tagger_forward.1} parent=1 // pred_check_branch
      %36 = sbr.rel (0) target = $region21
    $region20: #{lstm_tagger_forward.1} parent=1 // pred_region
      _
    $region21: #{lstm_tagger_forward.1} parent=1 // pred_fallthru
      _
    // Predicated region
    $region22: #{lstm_tagger_forward.1} parent=1 // pred_check
      _
    $region23: #{lstm_tagger_forward.1} parent=1 // pred_check_branch
      %38 = sbr.rel (0) target = $region25
    $region24: #{lstm_tagger_forward.1} parent=1 // pred_region
      _
    $region25: #{lstm_tagger_forward.1} parent=1 // pred_fallthru
      _
    // Predicated region
    $region26: #{lstm_tagger_forward.1} parent=1 // pred_check
      _
    $region27: #{lstm_tagger_forward.1} parent=1 // pred_check_branch
      %40 = sbr.rel (0) target = $region29
    $region28: #{lstm_tagger_forward.1} parent=1 // pred_region
      _
    $region29: #{lstm_tagger_forward.1} parent=1 // pred_fallthru
      _
    // Predicated region
    $region30: #{lstm_tagger_forward.1} parent=1 // pred_check
      _
    $region31: #{lstm_tagger_forward.1} parent=1 // pred_check_branch
      %42 = sbr.rel (0) target = $region33
    $region32: #{lstm_tagger_forward.1} parent=1 // pred_region
      _
    $region33: #{lstm_tagger_forward.1} parent=1 // pred_fallthru
      _
    // Predicated region
    $region34: #{lstm_tagger_forward.1} parent=1 // pred_check
      _
    $region35: #{lstm_tagger_forward.1} parent=1 // pred_check_branch
      %44 = sbr.rel (0) target = $region37
    $region36: #{lstm_tagger_forward.1} parent=1 // pred_region
      _
    $region37: #{lstm_tagger_forward.1} parent=1 // pred_fallthru
      _
    // Predicated region
    $region38: #{lstm_tagger_forward.1} parent=1 // pred_check
      _
    $region39: #{lstm_tagger_forward.1} parent=1 // pred_check_branch
      %46 = sbr.rel (0) target = $region41
    $region40: #{lstm_tagger_forward.1} parent=1 // pred_region
      %47 = dma.done [#allocation7], 16
    $region41: #{lstm_tagger_forward.1} parent=1 // pred_fallthru
      _
    %48 = sfence
    %s50 = sld [smem:[#allocation5]]
    %s51 = scalar_lea.vmem %s1, %s50
    %v52 = vld [vmem:[%s51] sm:$0x1]
    %vm53 = vcmask 253952
    %54 = vst.msk [vmem:[#allocation2] sm:$0x1] %vm53, %v52
    %s55 = sld [smem:[#allocation5 + $0x1]]
    %s56 = scalar_lea.vmem %s1, %s55
    %v57 = vld [vmem:[%s56] sm:$0x1]
    %58 = vst.msk [vmem:[#allocation2 + $0x1] sm:$0x1] %vm53, %v57
    %s59 = sld [smem:[#allocation5 + $0x2]]
    %s60 = scalar_lea.vmem %s1, %s59
    %v61 = vld [vmem:[%s60] sm:$0x1]
    %62 = vst.msk [vmem:[#allocation2 + $0x2] sm:$0x1] %vm53, %v61
    %s63 = sld [smem:[#allocation5 + $0x3]]
    %s64 = scalar_lea.vmem %s1, %s63
    %v65 = vld [vmem:[%s64] sm:$0x1]
    %66 = vst.msk [vmem:[#allocation2 + $0x3] sm:$0x1] %vm53, %v65
    %s67 = sld [smem:[#allocation5 + $0x4]]
    %s68 = scalar_lea.vmem %s1, %s67
    %v69 = vld [vmem:[%s68] sm:$0x1]
    %70 = vst.msk [vmem:[#allocation2 + $0x4] sm:$0x1] %vm53, %v69
    %s71 = sld [smem:[#allocation5 + $0x5]]
    %s72 = scalar_lea.vmem %s1, %s71
    %v73 = vld [vmem:[%s72] sm:$0x1]
    %74 = vst.msk [vmem:[#allocation2 + $0x5] sm:$0x1] %vm53, %v73
    %s75 = sld [smem:[#allocation5 + $0x6]]
    %s76 = scalar_lea.vmem %s1, %s75
    %v77 = vld [vmem:[%s76] sm:$0x1]
    %78 = vst.msk [vmem:[#allocation2 + $0x6] sm:$0x1] %vm53, %v77
    %s79 = sld [smem:[#allocation5 + $0x7]]
    %s80 = scalar_lea.vmem %s1, %s79
    %v81 = vld [vmem:[%s80] sm:$0x1]
    %82 = vst.msk [vmem:[#allocation2 + $0x7] sm:$0x1] %vm53, %v81
    %v83 = vld [vmem:[#allocation2] sm:$0xff]
    %v84 = vpack.c.bf16 %v83, %v83
    %v85 = vld [vmem:[%s2] sm:$0xff]
    %v86 = vld [vmem:[%s2 + $0x8] sm:$0xff]
    %v87 = vld [vmem:[%s2 + $0x10] sm:$0xff]
    %v88 = vld [vmem:[%s2 + $0x18] sm:$0xff]
    %v89 = vld [vmem:[%s4] sm:$0x3]
    %v91 = vlaneseq
    %v92 = vshrl.u32 %v91, 7
    %v93 = vsub.s32 0, %v92
    %v94 = vrot.slane %v89, %v93
    %v95 = vlaneseq
    %v96 = vshrl.u32 %v95, 7
    %v97 = vsub.s32 1, %v96
    %v98 = vrot.slane %v89, %v97
    %v105 = vunpack.c.l.b16 %v85
    %v106 = vunpack.c.h.b16 %v85
    %v107 = vunpack.c.l.b16 %v86
    %v108 = vunpack.c.h.b16 %v86
    %v109 = vunpack.c.l.b16 %v87
    %v110 = vunpack.c.h.b16 %v87
    %v111 = vunpack.c.l.b16 %v88
    %v112 = vunpack.c.h.b16 %v88
    %v113 = vpack.c.b16 %v107, %v105
    %v114 = vpack.c.b16 %v108, %v106
    %v115 = vpack.c.b16 %v111, %v109
    %v116 = vpack.c.b16 %v112, %v110
    %vm121 = vcmask 261120
    %v123 = vsel %vm121, %v84, 0
    %125 = vmatprep.subr.bf16.mxu0 %v114
    %126 = vmatpush1.bf16.msra.mxu0 %v113
    %127 = vmatprep.subr.bf16.mxu0 %v116
    %128 = vmatpush1.bf16.msra.mxu0 %v115
    %129 = vmatprep.subr.bf16.mxu0 0
    %130 = vmatpush1.bf16.msra.mxu0 0
    %131 = vmatprep.subr.bf16.mxu0 0
    %132 = vmatpush1.bf16.msra.mxu0 0
    %133 = vmatprep.subr.bf16.mxu0 0
    %134 = vmatpush1.bf16.msra.mxu0 0
    %135 = vmatprep.subr.bf16.mxu0 0
    %136 = vmatpush1.bf16.msra.mxu0 0
    %137 = vmatprep.subr.bf16.mxu0 0
    %138 = vmatpush1.bf16.msra.mxu0 0
    %139 = vmatprep.subr.bf16.mxu0 0
    %140 = vmatpush1.bf16.msra.mxu0 0
    %141 = vmatprep.subr.bf16.mxu0 0
    %142 = vmatpush1.bf16.msra.mxu0 0
    %143 = vmatprep.subr.bf16.mxu0 0
    %144 = vmatpush1.bf16.msra.mxu0 0
    %145 = vmatprep.subr.bf16.mxu0 0
    %146 = vmatpush1.bf16.msra.mxu0 0
    %147 = vmatprep.subr.bf16.mxu0 0
    %148 = vmatpush1.bf16.msra.mxu0 0
    %149 = vmatprep.subr.bf16.mxu0 0
    %150 = vmatpush1.bf16.msra.mxu0 0
    %151 = vmatprep.subr.bf16.mxu0 0
    %152 = vmatpush1.bf16.msra.mxu0 0
    %153 = vmatprep.subr.bf16.mxu0 0
    %154 = vmatpush1.bf16.msra.mxu0 0
    %155 = vmatprep.subr.bf16.mxu0 0
    %156 = vmatpush1.bf16.msra.mxu0 0
    %157 = vmatprep.mubr.bf16.mxu0 0
    %158 = vmatmul.mubr.bf16.gmra.mrb[0].mxu0 %v123
    %v159 = vpop.f32.mrb[0].mxu0
    %v160 = vadd.f32 %v94, %v159
    %v161 = vpop.f32.mrb[0].mxu0
    %v162 = vadd.f32 %v98, %v161
    %v163 = vpop.f32.mrb[0].mxu0
    %v164 = vpop.f32.mrb[0].mxu0
    %165 = vdwg.mxu0
    %v166 = vld [vmem:[%s3] sm:$0xff]
    %v167 = vld [vmem:[%s3 + $0x8] sm:$0xff]
    %v168 = vld [vmem:[%s3 + $0x10] sm:$0xff]
    %v169 = vld [vmem:[%s3 + $0x18] sm:$0xff]
    %v170 = vlaneseq
    %v171 = vshrl.u32 %v170, 7
    %vm172 = vcmp.eq.s32.totalorder %v171, 0
    %v173 = vlaneseq
    %v174 = vshrl.u32 %v173, 7
    %v175 = vsub.s32 0, %v174
    %v176 = vrot.slane %v160, %v175
    %v177 = vlaneseq
    %v178 = vshrl.u32 %v177, 7
    %v179 = vsub.s32 7, %v178
    %v180 = vrot.slane %v162, %v179
    %v181 = vsel %vm172, %v176, %v180
    %v182 = vxor.u32 %v181, 2147483648
    %v183 = vmul.f32 %v182, 1.442695
    %v184 = vpow.pop %v183
    %v185 = vadd.f32 %v184, 1.0
    %v186 = vrcp.pop %v185
    %v187 = vmul.f32 1.0, %v186
    %v188 = vtanh.pop %v181
    %v189 = vmul.f32 %v187, 0.0
    %191 = vrot.lane.b32.xlu0 %v188, 64
    %v192 = vpop.permute.xlu0 %191
    %v194 = vmul.f32 %v187, %v192
    %196 = vrot.lane.b32.xlu0 %v194, 32
    %v197 = vpop.permute.xlu0 %196
    %v199 = vadd.f32 %v189, %v197
    %v200 = vtanh.pop %v199
    %202 = vrot.lane.b32.xlu0 %v200, 64
    %v203 = vpop.permute.xlu0 %202
    %v205 = vmul.f32 %v187, %v203
    %207 = vrot.lane.b32.xlu0 %v205, 32
    %v208 = vpop.permute.xlu0 %207
    %210 = vst.msk [vmem:[#allocation3] sm:$0x1] %vm53, %v208
    %vm211 = vcmask 254977
    %212 = vst.msk [vmem:[#allocation4 + $0x6] sm:$0x2] %vm211, %v208
    %v213 = vpack.c.bf16 %v205, %v205
    %215 = vrot.lane.b32.xlu0 %v213, 32
    %v216 = vpop.permute.xlu0 %215
    %v221 = vunpack.c.l.b16 %v166
    %v222 = vunpack.c.h.b16 %v166
    %v223 = vunpack.c.l.b16 %v167
    %v224 = vunpack.c.h.b16 %v167
    %v225 = vunpack.c.l.b16 %v168
    %v226 = vunpack.c.h.b16 %v168
    %v227 = vunpack.c.l.b16 %v169
    %v228 = vunpack.c.h.b16 %v169
    %v229 = vpack.c.b16 %v223, %v221
    %v230 = vpack.c.b16 %v224, %v222
    %v231 = vpack.c.b16 %v227, %v225
    %v232 = vpack.c.b16 %v228, %v226
    %v238 = vsel %vm121, %v216, 0
    %240 = vmatprep.subr.bf16.mxu0 %v230
    %241 = vmatpush1.bf16.msra.mxu0 %v229
    %242 = vmatprep.subr.bf16.mxu0 %v232
    %243 = vmatpush1.bf16.msra.mxu0 %v231
    %244 = vmatprep.subr.bf16.mxu0 0
    %245 = vmatpush1.bf16.msra.mxu0 0
    %246 = vmatprep.subr.bf16.mxu0 0
    %247 = vmatpush1.bf16.msra.mxu0 0
    %248 = vmatprep.subr.bf16.mxu0 0
    %249 = vmatpush1.bf16.msra.mxu0 0
    %250 = vmatprep.subr.bf16.mxu0 0
    %251 = vmatpush1.bf16.msra.mxu0 0
    %252 = vmatprep.subr.bf16.mxu0 0
    %253 = vmatpush1.bf16.msra.mxu0 0
    %254 = vmatprep.subr.bf16.mxu0 0
    %255 = vmatpush1.bf16.msra.mxu0 0
    %256 = vmatprep.subr.bf16.mxu0 0
    %257 = vmatpush1.bf16.msra.mxu0 0
    %258 = vmatprep.subr.bf16.mxu0 0
    %259 = vmatpush1.bf16.msra.mxu0 0
    %260 = vmatprep.subr.bf16.mxu0 0
    %261 = vmatpush1.bf16.msra.mxu0 0
    %262 = vmatprep.subr.bf16.mxu0 0
    %263 = vmatpush1.bf16.msra.mxu0 0
    %264 = vmatprep.subr.bf16.mxu0 0
    %265 = vmatpush1.bf16.msra.mxu0 0
    %266 = vmatprep.subr.bf16.mxu0 0
    %267 = vmatpush1.bf16.msra.mxu0 0
    %268 = vmatprep.subr.bf16.mxu0 0
    %269 = vmatpush1.bf16.msra.mxu0 0
    %270 = vmatprep.subr.bf16.mxu0 0
    %271 = vmatpush1.bf16.msra.mxu0 0
    %272 = vmatprep.mubr.bf16.mxu0 0
    %273 = vmatmul.mubr.bf16.gmra.mrb[0].mxu0 %v238
    %v274 = vpop.f32.mrb[0].mxu0
    %v275 = vadd.f32 0.0, %v274
    %v276 = vpop.f32.mrb[0].mxu0
    %v277 = vadd.f32 0.0, %v276
    %v278 = vpop.f32.mrb[0].mxu0
    %v279 = vpop.f32.mrb[0].mxu0
    %280 = vdwg.mxu0
    %v282 = vrot.slane %v275, 7
    %v284 = vadd.f32 %v160, %v282
    %v286 = vrot.slane %v277, 3
    %v288 = vadd.f32 %v162, %v286
    %v289 = vlaneseq
    %v290 = vshrl.u32 %v289, 7
    %v291 = vsub.s32 1, %v290
    %v292 = vrot.slane %v284, %v291
    %v293 = vlaneseq
    %v294 = vshrl.u32 %v293, 7
    %v295 = vsub.s32 6, %v294
    %v296 = vrot.slane %v288, %v295
    %v297 = vsel %vm172, %v292, %v296
    %v298 = vxor.u32 %v297, 2147483648
    %v299 = vmul.f32 %v298, 1.442695
    %v300 = vpow.pop %v299
    %v301 = vadd.f32 %v300, 1.0
    %v302 = vrcp.pop %v301
    %v303 = vmul.f32 1.0, %v302
    %v304 = vtanh.pop %v297
    %v305 = vmul.f32 %v303, %v199
    %307 = vrot.lane.b32.xlu0 %v304, 64
    %v308 = vpop.permute.xlu0 %307
    %v310 = vmul.f32 %v303, %v308
    %312 = vrot.lane.b32.xlu0 %v310, 32
    %v313 = vpop.permute.xlu0 %312
    %v315 = vadd.f32 %v305, %v313
    %v316 = vtanh.pop %v315
    %318 = vrot.lane.b32.xlu0 %v316, 64
    %v319 = vpop.permute.xlu0 %318
    %v321 = vmul.f32 %v303, %v319
    %323 = vrot.lane.b32.xlu0 %v321, 32
    %v324 = vpop.permute.xlu0 %323
    %326 = vst.msk [vmem:[#allocation3 + $0x1] sm:$0x1] %vm53, %v324
    %327 = vst.msk [vmem:[#allocation4 + $0x5] sm:$0x2] %vm211, %v324
    %v328 = vpack.c.bf16 %v321, %v321
    %330 = vrot.lane.b32.xlu0 %v328, 32
    %v331 = vpop.permute.xlu0 %330
    %v333 = vsel %vm121, %v331, 0
    %335 = vmatprep.subr.bf16.mxu0 %v230
    %336 = vmatpush1.bf16.msra.mxu0 %v229
    %337 = vmatprep.subr.bf16.mxu0 %v232
    %338 = vmatpush1.bf16.msra.mxu0 %v231
    %339 = vmatprep.subr.bf16.mxu0 0
    %340 = vmatpush1.bf16.msra.mxu0 0
    %341 = vmatprep.subr.bf16.mxu0 0
    %342 = vmatpush1.bf16.msra.mxu0 0
    %343 = vmatprep.subr.bf16.mxu0 0
    %344 = vmatpush1.bf16.msra.mxu0 0
    %345 = vmatprep.subr.bf16.mxu0 0
    %346 = vmatpush1.bf16.msra.mxu0 0
    %347 = vmatprep.subr.bf16.mxu0 0
    %348 = vmatpush1.bf16.msra.mxu0 0
    %349 = vmatprep.subr.bf16.mxu0 0
    %350 = vmatpush1.bf16.msra.mxu0 0
    %351 = vmatprep.subr.bf16.mxu0 0
    %352 = vmatpush1.bf16.msra.mxu0 0
    %353 = vmatprep.subr.bf16.mxu0 0
    %354 = vmatpush1.bf16.msra.mxu0 0
    %355 = vmatprep.subr.bf16.mxu0 0
    %356 = vmatpush1.bf16.msra.mxu0 0
    %357 = vmatprep.subr.bf16.mxu0 0
    %358 = vmatpush1.bf16.msra.mxu0 0
    %359 = vmatprep.subr.bf16.mxu0 0
    %360 = vmatpush1.bf16.msra.mxu0 0
    %361 = vmatprep.subr.bf16.mxu0 0
    %362 = vmatpush1.bf16.msra.mxu0 0
    %363 = vmatprep.subr.bf16.mxu0 0
    %364 = vmatpush1.bf16.msra.mxu0 0
    %365 = vmatprep.subr.bf16.mxu0 0
    %366 = vmatpush1.bf16.msra.mxu0 0
    %367 = vmatprep.mubr.bf16.mxu0 0
    %368 = vmatmul.mubr.bf16.gmra.mrb[0].mxu0 %v333
    %v369 = vpop.f32.mrb[0].mxu0
    %v370 = vadd.f32 0.0, %v369
    %v371 = vpop.f32.mrb[0].mxu0
    %v372 = vadd.f32 0.0, %v371
    %v373 = vpop.f32.mrb[0].mxu0
    %v374 = vpop.f32.mrb[0].mxu0
    %375 = vdwg.mxu0
    %v377 = vrot.slane %v370, 6
    %v379 = vadd.f32 %v160, %v377
    %v381 = vrot.slane %v372, 4
    %v383 = vadd.f32 %v162, %v381
    %v384 = vlaneseq
    %v385 = vshrl.u32 %v384, 7
    %v386 = vsub.s32 2, %v385
    %v387 = vrot.slane %v379, %v386
    %v388 = vlaneseq
    %v389 = vshrl.u32 %v388, 7
    %v390 = vsub.s32 5, %v389
    %v391 = vrot.slane %v383, %v390
    %v392 = vsel %vm172, %v387, %v391
    %v393 = vxor.u32 %v392, 2147483648
    %v394 = vmul.f32 %v393, 1.442695
    %v395 = vpow.pop %v394
    %v396 = vadd.f32 %v395, 1.0
    %v397 = vrcp.pop %v396
    %v398 = vmul.f32 1.0, %v397
    %v399 = vtanh.pop %v392
    %v400 = vmul.f32 %v398, %v315
    %402 = vrot.lane.b32.xlu0 %v399, 64
    %v403 = vpop.permute.xlu0 %402
    %v405 = vmul.f32 %v398, %v403
    %407 = vrot.lane.b32.xlu0 %v405, 32
    %v408 = vpop.permute.xlu0 %407
    %v410 = vadd.f32 %v400, %v408
    %v411 = vtanh.pop %v410
    %413 = vrot.lane.b32.xlu0 %v411, 64
    %v414 = vpop.permute.xlu0 %413
    %v416 = vmul.f32 %v398, %v414
    %418 = vrot.lane.b32.xlu0 %v416, 32
    %v419 = vpop.permute.xlu0 %418
    %421 = vst.msk [vmem:[#allocation3 + $0x2] sm:$0x1] %vm53, %v419
    %422 = vst.msk [vmem:[#allocation4 + $0x4] sm:$0x2] %vm211, %v419
    %v423 = vpack.c.bf16 %v416, %v416
    %425 = vrot.lane.b32.xlu0 %v423, 32
    %v426 = vpop.permute.xlu0 %425
    %v428 = vsel %vm121, %v426, 0
    %430 = vmatprep.subr.bf16.mxu0 %v230
    %431 = vmatpush1.bf16.msra.mxu0 %v229
    %432 = vmatprep.subr.bf16.mxu0 %v232
    %433 = vmatpush1.bf16.msra.mxu0 %v231
    %434 = vmatprep.subr.bf16.mxu0 0
    %435 = vmatpush1.bf16.msra.mxu0 0
    %436 = vmatprep.subr.bf16.mxu0 0
    %437 = vmatpush1.bf16.msra.mxu0 0
    %438 = vmatprep.subr.bf16.mxu0 0
    %439 = vmatpush1.bf16.msra.mxu0 0
    %440 = vmatprep.subr.bf16.mxu0 0
    %441 = vmatpush1.bf16.msra.mxu0 0
    %442 = vmatprep.subr.bf16.mxu0 0
    %443 = vmatpush1.bf16.msra.mxu0 0
    %444 = vmatprep.subr.bf16.mxu0 0
    %445 = vmatpush1.bf16.msra.mxu0 0
    %446 = vmatprep.subr.bf16.mxu0 0
    %447 = vmatpush1.bf16.msra.mxu0 0
    %448 = vmatprep.subr.bf16.mxu0 0
    %449 = vmatpush1.bf16.msra.mxu0 0
    %450 = vmatprep.subr.bf16.mxu0 0
    %451 = vmatpush1.bf16.msra.mxu0 0
    %452 = vmatprep.subr.bf16.mxu0 0
    %453 = vmatpush1.bf16.msra.mxu0 0
    %454 = vmatprep.subr.bf16.mxu0 0
    %455 = vmatpush1.bf16.msra.mxu0 0
    %456 = vmatprep.subr.bf16.mxu0 0
    %457 = vmatpush1.bf16.msra.mxu0 0
    %458 = vmatprep.subr.bf16.mxu0 0
    %459 = vmatpush1.bf16.msra.mxu0 0
    %460 = vmatprep.subr.bf16.mxu0 0
    %461 = vmatpush1.bf16.msra.mxu0 0
    %462 = vmatprep.mubr.bf16.mxu0 0
    %463 = vmatmul.mubr.bf16.gmra.mrb[0].mxu0 %v428
    %v464 = vpop.f32.mrb[0].mxu0
    %v465 = vadd.f32 0.0, %v464
    %v466 = vpop.f32.mrb[0].mxu0
    %v467 = vadd.f32 0.0, %v466
    %v468 = vpop.f32.mrb[0].mxu0
    %v469 = vpop.f32.mrb[0].mxu0
    %470 = vdwg.mxu0
    %v472 = vrot.slane %v465, 5
    %v474 = vadd.f32 %v160, %v472
    %v476 = vrot.slane %v467, 5
    %v478 = vadd.f32 %v162, %v476
    %v479 = vlaneseq
    %v480 = vshrl.u32 %v479, 7
    %v481 = vsub.s32 3, %v480
    %v482 = vrot.slane %v474, %v481
    %v483 = vlaneseq
    %v484 = vshrl.u32 %v483, 7
    %v485 = vsub.s32 4, %v484
    %v486 = vrot.slane %v478, %v485
    %v487 = vsel %vm172, %v482, %v486
    %v488 = vxor.u32 %v487, 2147483648
    %v489 = vmul.f32 %v488, 1.442695
    %v490 = vpow.pop %v489
    %v491 = vadd.f32 %v490, 1.0
    %v492 = vrcp.pop %v491
    %v493 = vmul.f32 1.0, %v492
    %v494 = vtanh.pop %v487
    %v495 = vmul.f32 %v493, %v410
    %497 = vrot.lane.b32.xlu0 %v494, 64
    %v498 = vpop.permute.xlu0 %497
    %v500 = vmul.f32 %v493, %v498
    %502 = vrot.lane.b32.xlu0 %v500, 32
    %v503 = vpop.permute.xlu0 %502
    %v505 = vadd.f32 %v495, %v503
    %v506 = vtanh.pop %v505
    %508 = vrot.lane.b32.xlu0 %v506, 64
    %v509 = vpop.permute.xlu0 %508
    %v511 = vmul.f32 %v493, %v509
    %513 = vrot.lane.b32.xlu0 %v511, 32
    %v514 = vpop.permute.xlu0 %513
    %516 = vst.msk [vmem:[#allocation3 + $0x3] sm:$0x1] %vm53, %v514
    %517 = vst.msk [vmem:[#allocation4 + $0x3] sm:$0x2] %vm211, %v514
    %v518 = vpack.c.bf16 %v511, %v511
    %520 = vrot.lane.b32.xlu0 %v518, 32
    %v521 = vpop.permute.xlu0 %520
    %v523 = vsel %vm121, %v521, 0
    %525 = vmatprep.subr.bf16.mxu0 %v230
    %526 = vmatpush1.bf16.msra.mxu0 %v229
    %527 = vmatprep.subr.bf16.mxu0 %v232
    %528 = vmatpush1.bf16.msra.mxu0 %v231
    %529 = vmatprep.subr.bf16.mxu0 0
    %530 = vmatpush1.bf16.msra.mxu0 0
    %531 = vmatprep.subr.bf16.mxu0 0
    %532 = vmatpush1.bf16.msra.mxu0 0
    %533 = vmatprep.subr.bf16.mxu0 0
    %534 = vmatpush1.bf16.msra.mxu0 0
    %535 = vmatprep.subr.bf16.mxu0 0
    %536 = vmatpush1.bf16.msra.mxu0 0
    %537 = vmatprep.subr.bf16.mxu0 0
    %538 = vmatpush1.bf16.msra.mxu0 0
    %539 = vmatprep.subr.bf16.mxu0 0
    %540 = vmatpush1.bf16.msra.mxu0 0
    %541 = vmatprep.subr.bf16.mxu0 0
    %542 = vmatpush1.bf16.msra.mxu0 0
    %543 = vmatprep.subr.bf16.mxu0 0
    %544 = vmatpush1.bf16.msra.mxu0 0
    %545 = vmatprep.subr.bf16.mxu0 0
    %546 = vmatpush1.bf16.msra.mxu0 0
    %547 = vmatprep.subr.bf16.mxu0 0
    %548 = vmatpush1.bf16.msra.mxu0 0
    %549 = vmatprep.subr.bf16.mxu0 0
    %550 = vmatpush1.bf16.msra.mxu0 0
    %551 = vmatprep.subr.bf16.mxu0 0
    %552 = vmatpush1.bf16.msra.mxu0 0
    %553 = vmatprep.subr.bf16.mxu0 0
    %554 = vmatpush1.bf16.msra.mxu0 0
    %555 = vmatprep.subr.bf16.mxu0 0
    %556 = vmatpush1.bf16.msra.mxu0 0
    %557 = vmatprep.mubr.bf16.mxu0 0
    %558 = vmatmul.mubr.bf16.gmra.mrb[0].mxu0 %v523
    %v559 = vpop.f32.mrb[0].mxu0
    %v560 = vadd.f32 0.0, %v559
    %v561 = vpop.f32.mrb[0].mxu0
    %v562 = vadd.f32 0.0, %v561
    %v563 = vpop.f32.mrb[0].mxu0
    %v564 = vpop.f32.mrb[0].mxu0
    %565 = vdwg.mxu0
    %v567 = vrot.slane %v560, 4
    %v569 = vadd.f32 %v160, %v567
    %v571 = vrot.slane %v562, 6
    %v573 = vadd.f32 %v162, %v571
    %v574 = vlaneseq
    %v575 = vshrl.u32 %v574, 7
    %v576 = vsub.s32 4, %v575
    %v577 = vrot.slane %v569, %v576
    %v578 = vlaneseq
    %v579 = vshrl.u32 %v578, 7
    %v580 = vsub.s32 3, %v579
    %v581 = vrot.slane %v573, %v580
    %v582 = vsel %vm172, %v577, %v581
    %v583 = vxor.u32 %v582, 2147483648
    %v584 = vmul.f32 %v583, 1.442695
    %v585 = vpow.pop %v584
    %v586 = vadd.f32 %v585, 1.0
    %v587 = vrcp.pop %v586
    %v588 = vmul.f32 1.0, %v587
    %v589 = vtanh.pop %v582
    %v590 = vmul.f32 %v588, %v505
    %592 = vrot.lane.b32.xlu0 %v589, 64
    %v593 = vpop.permute.xlu0 %592
    %v595 = vmul.f32 %v588, %v593
    %597 = vrot.lane.b32.xlu0 %v595, 32
    %v598 = vpop.permute.xlu0 %597
    %v600 = vadd.f32 %v590, %v598
    %v601 = vtanh.pop %v600
    %603 = vrot.lane.b32.xlu0 %v601, 64
    %v604 = vpop.permute.xlu0 %603
    %v606 = vmul.f32 %v588, %v604
    %608 = vrot.lane.b32.xlu0 %v606, 32
    %v609 = vpop.permute.xlu0 %608
    %611 = vst.msk [vmem:[#allocation3 + $0x4] sm:$0x1] %vm53, %v609
    %612 = vst.msk [vmem:[#allocation4 + $0x2] sm:$0x2] %vm211, %v609
    %v613 = vpack.c.bf16 %v606, %v606
    %615 = vrot.lane.b32.xlu0 %v613, 32
    %v616 = vpop.permute.xlu0 %615
    %v618 = vsel %vm121, %v616, 0
    %620 = vmatprep.subr.bf16.mxu0 %v230
    %621 = vmatpush1.bf16.msra.mxu0 %v229
    %622 = vmatprep.subr.bf16.mxu0 %v232
    %623 = vmatpush1.bf16.msra.mxu0 %v231
    %624 = vmatprep.subr.bf16.mxu0 0
    %625 = vmatpush1.bf16.msra.mxu0 0
    %626 = vmatprep.subr.bf16.mxu0 0
    %627 = vmatpush1.bf16.msra.mxu0 0
    %628 = vmatprep.subr.bf16.mxu0 0
    %629 = vmatpush1.bf16.msra.mxu0 0
    %630 = vmatprep.subr.bf16.mxu0 0
    %631 = vmatpush1.bf16.msra.mxu0 0
    %632 = vmatprep.subr.bf16.mxu0 0
    %633 = vmatpush1.bf16.msra.mxu0 0
    %634 = vmatprep.subr.bf16.mxu0 0
    %635 = vmatpush1.bf16.msra.mxu0 0
    %636 = vmatprep.subr.bf16.mxu0 0
    %637 = vmatpush1.bf16.msra.mxu0 0
    %638 = vmatprep.subr.bf16.mxu0 0
    %639 = vmatpush1.bf16.msra.mxu0 0
    %640 = vmatprep.subr.bf16.mxu0 0
    %641 = vmatpush1.bf16.msra.mxu0 0
    %642 = vmatprep.subr.bf16.mxu0 0
    %643 = vmatpush1.bf16.msra.mxu0 0
    %644 = vmatprep.subr.bf16.mxu0 0
    %645 = vmatpush1.bf16.msra.mxu0 0
    %646 = vmatprep.subr.bf16.mxu0 0
    %647 = vmatpush1.bf16.msra.mxu0 0
    %648 = vmatprep.subr.bf16.mxu0 0
    %649 = vmatpush1.bf16.msra.mxu0 0
    %650 = vmatprep.subr.bf16.mxu0 0
    %651 = vmatpush1.bf16.msra.mxu0 0
    %652 = vmatprep.mubr.bf16.mxu0 0
    %653 = vmatmul.mubr.bf16.gmra.mrb[0].mxu0 %v618
    %v654 = vpop.f32.mrb[0].mxu0
    %v655 = vadd.f32 0.0, %v654
    %v656 = vpop.f32.mrb[0].mxu0
    %v657 = vadd.f32 0.0, %v656
    %v658 = vpop.f32.mrb[0].mxu0
    %v659 = vpop.f32.mrb[0].mxu0
    %660 = vdwg.mxu0
    %v662 = vrot.slane %v655, 3
    %v664 = vadd.f32 %v160, %v662
    %v666 = vrot.slane %v657, 7
    %v668 = vadd.f32 %v162, %v666
    %v669 = vlaneseq
    %v670 = vshrl.u32 %v669, 7
    %v671 = vsub.s32 5, %v670
    %v672 = vrot.slane %v664, %v671
    %v673 = vlaneseq
    %v674 = vshrl.u32 %v673, 7
    %v675 = vsub.s32 2, %v674
    %v676 = vrot.slane %v668, %v675
    %v677 = vsel %vm172, %v672, %v676
    %v678 = vxor.u32 %v677, 2147483648
    %v679 = vmul.f32 %v678, 1.442695
    %v680 = vpow.pop %v679
    %v681 = vadd.f32 %v680, 1.0
    %v682 = vrcp.pop %v681
    %v683 = vmul.f32 1.0, %v682
    %v684 = vtanh.pop %v677
    %v685 = vmul.f32 %v683, %v600
    %687 = vrot.lane.b32.xlu0 %v684, 64
    %v688 = vpop.permute.xlu0 %687
    %v690 = vmul.f32 %v683, %v688
    %692 = vrot.lane.b32.xlu0 %v690, 32
    %v693 = vpop.permute.xlu0 %692
    %v695 = vadd.f32 %v685, %v693
    %v696 = vtanh.pop %v695
    %698 = vrot.lane.b32.xlu0 %v696, 64
    %v699 = vpop.permute.xlu0 %698
    %v701 = vmul.f32 %v683, %v699
    %703 = vrot.lane.b32.xlu0 %v701, 32
    %v704 = vpop.permute.xlu0 %703
    %706 = vst.msk [vmem:[#allocation3 + $0x5] sm:$0x1] %vm53, %v704
    %707 = vst.msk [vmem:[#allocation4 + $0x1] sm:$0x2] %vm211, %v704
    %v708 = vpack.c.bf16 %v701, %v701
    %710 = vrot.lane.b32.xlu0 %v708, 32
    %v711 = vpop.permute.xlu0 %710
    %v713 = vsel %vm121, %v711, 0
    %715 = vmatprep.subr.bf16.mxu0 %v230
    %716 = vmatpush1.bf16.msra.mxu0 %v229
    %717 = vmatprep.subr.bf16.mxu0 %v232
    %718 = vmatpush1.bf16.msra.mxu0 %v231
    %719 = vmatprep.subr.bf16.mxu0 0
    %720 = vmatpush1.bf16.msra.mxu0 0
    %721 = vmatprep.subr.bf16.mxu0 0
    %722 = vmatpush1.bf16.msra.mxu0 0
    %723 = vmatprep.subr.bf16.mxu0 0
    %724 = vmatpush1.bf16.msra.mxu0 0
    %725 = vmatprep.subr.bf16.mxu0 0
    %726 = vmatpush1.bf16.msra.mxu0 0
    %727 = vmatprep.subr.bf16.mxu0 0
    %728 = vmatpush1.bf16.msra.mxu0 0
    %729 = vmatprep.subr.bf16.mxu0 0
    %730 = vmatpush1.bf16.msra.mxu0 0
    %731 = vmatprep.subr.bf16.mxu0 0
    %732 = vmatpush1.bf16.msra.mxu0 0
    %733 = vmatprep.subr.bf16.mxu0 0
    %734 = vmatpush1.bf16.msra.mxu0 0
    %735 = vmatprep.subr.bf16.mxu0 0
    %736 = vmatpush1.bf16.msra.mxu0 0
    %737 = vmatprep.subr.bf16.mxu0 0
    %738 = vmatpush1.bf16.msra.mxu0 0
    %739 = vmatprep.subr.bf16.mxu0 0
    %740 = vmatpush1.bf16.msra.mxu0 0
    %741 = vmatprep.subr.bf16.mxu0 0
    %742 = vmatpush1.bf16.msra.mxu0 0
    %743 = vmatprep.subr.bf16.mxu0 0
    %744 = vmatpush1.bf16.msra.mxu0 0
    %745 = vmatprep.subr.bf16.mxu0 0
    %746 = vmatpush1.bf16.msra.mxu0 0
    %747 = vmatprep.mubr.bf16.mxu0 0
    %748 = vmatmul.mubr.bf16.gmra.mrb[0].mxu0 %v713
    %v749 = vpop.f32.mrb[0].mxu0
    %v750 = vadd.f32 0.0, %v749
    %v751 = vpop.f32.mrb[0].mxu0
    %v752 = vadd.f32 0.0, %v751
    %v753 = vpop.f32.mrb[0].mxu0
    %v754 = vpop.f32.mrb[0].mxu0
    %755 = vdwg.mxu0
    %v757 = vrot.slane %v750, 2
    %v759 = vadd.f32 %v160, %v757
    %v760 = vadd.f32 %v162, %v752
    %v761 = vlaneseq
    %v762 = vshrl.u32 %v761, 7
    %v763 = vsub.s32 6, %v762
    %v764 = vrot.slane %v759, %v763
    %v765 = vlaneseq
    %v766 = vshrl.u32 %v765, 7
    %v767 = vsub.s32 1, %v766
    %v768 = vrot.slane %v760, %v767
    %v769 = vsel %vm172, %v764, %v768
    %v770 = vxor.u32 %v769, 2147483648
    %v771 = vmul.f32 %v770, 1.442695
    %v772 = vpow.pop %v771
    %v773 = vadd.f32 %v772, 1.0
    %v774 = vrcp.pop %v773
    %v775 = vmul.f32 1.0, %v774
    %v776 = vtanh.pop %v769
    %v777 = vmul.f32 %v775, %v695
    %779 = vrot.lane.b32.xlu0 %v776, 64
    %v780 = vpop.permute.xlu0 %779
    %v782 = vmul.f32 %v775, %v780
    %784 = vrot.lane.b32.xlu0 %v782, 32
    %v785 = vpop.permute.xlu0 %784
    %v787 = vadd.f32 %v777, %v785
    %v788 = vtanh.pop %v787
    %790 = vrot.lane.b32.xlu0 %v788, 64
    %v791 = vpop.permute.xlu0 %790
    %v793 = vmul.f32 %v775, %v791
    %795 = vrot.lane.b32.xlu0 %v793, 32
    %v796 = vpop.permute.xlu0 %795
    %798 = vst.msk [vmem:[#allocation3 + $0x6] sm:$0x1] %vm53, %v796
    %799 = vst.msk [vmem:[#allocation4] sm:$0x2] %vm211, %v796
    %v800 = vpack.c.bf16 %v793, %v793
    %802 = vrot.lane.b32.xlu0 %v800, 32
    %v803 = vpop.permute.xlu0 %802
    %v805 = vsel %vm121, %v803, 0
    %807 = vmatprep.subr.bf16.mxu0 %v230
    %808 = vmatpush1.bf16.msra.mxu0 %v229
    %809 = vmatprep.subr.bf16.mxu0 %v232
    %810 = vmatpush1.bf16.msra.mxu0 %v231
    %811 = vmatprep.subr.bf16.mxu0 0
    %812 = vmatpush1.bf16.msra.mxu0 0
    %813 = vmatprep.subr.bf16.mxu0 0
    %814 = vmatpush1.bf16.msra.mxu0 0
    %815 = vmatprep.subr.bf16.mxu0 0
    %816 = vmatpush1.bf16.msra.mxu0 0
    %817 = vmatprep.subr.bf16.mxu0 0
    %818 = vmatpush1.bf16.msra.mxu0 0
    %819 = vmatprep.subr.bf16.mxu0 0
    %820 = vmatpush1.bf16.msra.mxu0 0
    %821 = vmatprep.subr.bf16.mxu0 0
    %822 = vmatpush1.bf16.msra.mxu0 0
    %823 = vmatprep.subr.bf16.mxu0 0
    %824 = vmatpush1.bf16.msra.mxu0 0
    %825 = vmatprep.subr.bf16.mxu0 0
    %826 = vmatpush1.bf16.msra.mxu0 0
    %827 = vmatprep.subr.bf16.mxu0 0
    %828 = vmatpush1.bf16.msra.mxu0 0
    %829 = vmatprep.subr.bf16.mxu0 0
    %830 = vmatpush1.bf16.msra.mxu0 0
    %831 = vmatprep.subr.bf16.mxu0 0
    %832 = vmatpush1.bf16.msra.mxu0 0
    %833 = vmatprep.subr.bf16.mxu0 0
    %834 = vmatpush1.bf16.msra.mxu0 0
    %835 = vmatprep.subr.bf16.mxu0 0
    %836 = vmatpush1.bf16.msra.mxu0 0
    %837 = vmatprep.subr.bf16.mxu0 0
    %838 = vmatpush1.bf16.msra.mxu0 0
    %839 = vmatprep.mubr.bf16.mxu0 0
    %840 = vmatmul.mubr.bf16.gmra.mrb[0].mxu0 %v805
    %v841 = vpop.f32.mrb[0].mxu0
    %v842 = vadd.f32 0.0, %v841
    %v843 = vpop.f32.mrb[0].mxu0
    %v844 = vadd.f32 0.0, %v843
    %v845 = vpop.f32.mrb[0].mxu0
    %v846 = vpop.f32.mrb[0].mxu0
    %847 = vdwg.mxu0
    %v849 = vrot.slane %v842, 1
    %v851 = vadd.f32 %v160, %v849
    %v853 = vrot.slane %v844, 1
    %v855 = vadd.f32 %v162, %v853
    %v856 = vlaneseq
    %v857 = vshrl.u32 %v856, 7
    %v858 = vsub.s32 7, %v857
    %v859 = vrot.slane %v851, %v858
    %v860 = vlaneseq
    %v861 = vshrl.u32 %v860, 7
    %v862 = vsub.s32 0, %v861
    %v863 = vrot.slane %v855, %v862
    %v864 = vsel %vm172, %v859, %v863
    %v865 = vxor.u32 %v864, 2147483648
    %v866 = vmul.f32 %v865, 1.442695
    %v867 = vpow.pop %v866
    %v868 = vadd.f32 %v867, 1.0
    %v869 = vrcp.pop %v868
    %v870 = vmul.f32 1.0, %v869
    %v871 = vtanh.pop %v864
    %v872 = vmul.f32 %v870, %v787
    %874 = vrot.lane.b32.xlu0 %v871, 64
    %v875 = vpop.permute.xlu0 %874
    %v877 = vmul.f32 %v870, %v875
    %879 = vrot.lane.b32.xlu0 %v877, 32
    %v880 = vpop.permute.xlu0 %879
    %v882 = vadd.f32 %v872, %v880
    %v883 = vtanh.pop %v882
    %885 = vrot.lane.b32.xlu0 %v883, 64
    %v886 = vpop.permute.xlu0 %885
    %v888 = vmul.f32 %v870, %v886
    %890 = vrot.lane.b32.xlu0 %v888, 32
    %v891 = vpop.permute.xlu0 %890
    %893 = vst.msk [vmem:[#allocation3 + $0x7] sm:$0x1] %vm53, %v891
    %894 = vst.msk [vmem:[#allocation4 - $0x1] sm:$0x2] %vm211, %v891
    %v895 = vld [vmem:[#allocation3] sm:$0xff]
    %v896 = vld [vmem:[%s5] sm:$0xff]
    %v897 = vld [vmem:[%s5 + $0x8] sm:$0xff]
    %v898 = vld [vmem:[%s5 + $0x10] sm:$0xff]
    %v899 = vld [vmem:[%s5 + $0x18] sm:$0xff]
    %v900 = vld [vmem:[#allocation4] sm:$0xff]
    %v901 = vld [vmem:[%s6] sm:$0xff]
    %v902 = vld [vmem:[%s6 + $0x8] sm:$0xff]
    %v903 = vld [vmem:[%s6 + $0x10] sm:$0xff]
    %v904 = vld [vmem:[%s6 + $0x18] sm:$0xff]
    %v906 = vsel %vm121, %v900, 0
    %908 = vmatprep.subr.mxu0 0.0
    %909 = vmatpush1.msra.mxu0 %v901
    %910 = vmatprep.subr.mxu0 0.0
    %911 = vmatpush1.msra.mxu0 %v902
    %912 = vmatprep.subr.mxu0 0.0
    %913 = vmatpush1.msra.mxu0 %v903
    %914 = vmatprep.subr.mxu0 0.0
    %915 = vmatpush1.msra.mxu0 %v904
    %916 = vmatprep.subr.mxu0 0.0
    %917 = vmatpush1.msra.mxu0 0.0
    %918 = vmatprep.subr.mxu0 0.0
    %919 = vmatpush1.msra.mxu0 0.0
    %920 = vmatprep.subr.mxu0 0.0
    %921 = vmatpush1.msra.mxu0 0.0
    %922 = vmatprep.subr.mxu0 0.0
    %923 = vmatpush1.msra.mxu0 0.0
    %924 = vmatprep.subr.mxu0 0.0
    %925 = vmatpush1.msra.mxu0 0.0
    %926 = vmatprep.subr.mxu0 0.0
    %927 = vmatpush1.msra.mxu0 0.0
    %928 = vmatprep.subr.mxu0 0.0
    %929 = vmatpush1.msra.mxu0 0.0
    %930 = vmatprep.subr.mxu0 0.0
    %931 = vmatpush1.msra.mxu0 0.0
    %932 = vmatprep.subr.mxu0 0.0
    %933 = vmatpush1.msra.mxu0 0.0
    %934 = vmatprep.subr.mxu0 0.0
    %935 = vmatpush1.msra.mxu0 0.0
    %936 = vmatprep.subr.mxu0 0.0
    %937 = vmatpush1.msra.mxu0 0.0
    %938 = vmatprep.subr.mxu0 0.0
    %939 = vmatpush1.msra.mxu0 0.0
    %940 = vmatprep.subr.mxu0 0.0
    %941 = vmatpush1.msra.mxu0 0.0
    %942 = vmatprep.subr.mxu0 0.0
    %943 = vmatpush1.msra.mxu0 0.0
    %944 = vmatprep.subr.mxu0 0.0
    %945 = vmatpush1.msra.mxu0 0.0
    %946 = vmatprep.subr.mxu0 0.0
    %947 = vmatpush1.msra.mxu0 0.0
    %948 = vmatprep.subr.mxu0 0.0
    %949 = vmatpush1.msra.mxu0 0.0
    %950 = vmatprep.subr.mxu0 0.0
    %951 = vmatpush1.msra.mxu0 0.0
    %952 = vmatprep.subr.mxu0 0.0
    %953 = vmatpush1.msra.mxu0 0.0
    %954 = vmatprep.subr.mxu0 0.0
    %955 = vmatpush1.msra.mxu0 0.0
    %956 = vmatprep.subr.mxu0 0.0
    %957 = vmatpush1.msra.mxu0 0.0
    %958 = vmatprep.subr.mxu0 0.0
    %959 = vmatpush1.msra.mxu0 0.0
    %960 = vmatprep.subr.mxu0 0.0
    %961 = vmatpush1.msra.mxu0 0.0
    %962 = vmatprep.subr.mxu0 0.0
    %963 = vmatpush1.msra.mxu0 0.0
    %964 = vmatprep.subr.mxu0 0.0
    %965 = vmatpush1.msra.mxu0 0.0
    %966 = vmatprep.subr.mxu0 0.0
    %967 = vmatpush1.msra.mxu0 0.0
    %968 = vmatprep.subr.mxu0 0.0
    %969 = vmatpush1.msra.mxu0 0.0
    %970 = vmatprep.subr.mxu0 0.0
    %971 = vmatpush1.msra.mxu0 0.0
    %972 = vmatprep.mubr.f32.mxu0 0.0
    %973 = vmatmul.mubr.f32.gmra.mrb[0].mxu0 %v906
    %v974 = vpop.f32.mrb[0].mxu0
    %v975 = vadd.f32 0.0, %v974
    %v976 = vpop.f32.mrb[0].mxu0
    %977 = vdwg.mxu0
    %v979 = vsel %vm121, %v895, 0
    %981 = vmatprep.subr.mxu0 0.0
    %982 = vmatpush1.msra.mxu0 %v896
    %983 = vmatprep.subr.mxu0 0.0
    %984 = vmatpush1.msra.mxu0 %v897
    %985 = vmatprep.subr.mxu0 0.0
    %986 = vmatpush1.msra.mxu0 %v898
    %987 = vmatprep.subr.mxu0 0.0
    %988 = vmatpush1.msra.mxu0 %v899
    %989 = vmatprep.subr.mxu0 0.0
    %990 = vmatpush1.msra.mxu0 0.0
    %991 = vmatprep.subr.mxu0 0.0
    %992 = vmatpush1.msra.mxu0 0.0
    %993 = vmatprep.subr.mxu0 0.0
    %994 = vmatpush1.msra.mxu0 0.0
    %995 = vmatprep.subr.mxu0 0.0
    %996 = vmatpush1.msra.mxu0 0.0
    %997 = vmatprep.subr.mxu0 0.0
    %998 = vmatpush1.msra.mxu0 0.0
    %999 = vmatprep.subr.mxu0 0.0
    %1000 = vmatpush1.msra.mxu0 0.0
    %1001 = vmatprep.subr.mxu0 0.0
    %1002 = vmatpush1.msra.mxu0 0.0
    %1003 = vmatprep.subr.mxu0 0.0
    %1004 = vmatpush1.msra.mxu0 0.0
    %1005 = vmatprep.subr.mxu0 0.0
    %1006 = vmatpush1.msra.mxu0 0.0
    %1007 = vmatprep.subr.mxu0 0.0
    %1008 = vmatpush1.msra.mxu0 0.0
    %1009 = vmatprep.subr.mxu0 0.0
    %1010 = vmatpush1.msra.mxu0 0.0
    %1011 = vmatprep.subr.mxu0 0.0
    %1012 = vmatpush1.msra.mxu0 0.0
    %1013 = vmatprep.subr.mxu0 0.0
    %1014 = vmatpush1.msra.mxu0 0.0
    %1015 = vmatprep.subr.mxu0 0.0
    %1016 = vmatpush1.msra.mxu0 0.0
    %1017 = vmatprep.subr.mxu0 0.0
    %1018 = vmatpush1.msra.mxu0 0.0
    %1019 = vmatprep.subr.mxu0 0.0
    %1020 = vmatpush1.msra.mxu0 0.0
    %1021 = vmatprep.subr.mxu0 0.0
    %1022 = vmatpush1.msra.mxu0 0.0
    %1023 = vmatprep.subr.mxu0 0.0
    %1024 = vmatpush1.msra.mxu0 0.0
    %1025 = vmatprep.subr.mxu0 0.0
    %1026 = vmatpush1.msra.mxu0 0.0
    %1027 = vmatprep.subr.mxu0 0.0
    %1028 = vmatpush1.msra.mxu0 0.0
    %1029 = vmatprep.subr.mxu0 0.0
    %1030 = vmatpush1.msra.mxu0 0.0
    %1031 = vmatprep.subr.mxu0 0.0
    %1032 = vmatpush1.msra.mxu0 0.0
    %1033 = vmatprep.subr.mxu0 0.0
    %1034 = vmatpush1.msra.mxu0 0.0
    %1035 = vmatprep.subr.mxu0 0.0
    %1036 = vmatpush1.msra.mxu0 0.0
    %1037 = vmatprep.subr.mxu0 0.0
    %1038 = vmatpush1.msra.mxu0 0.0
    %1039 = vmatprep.subr.mxu0 0.0
    %1040 = vmatpush1.msra.mxu0 0.0
    %1041 = vmatprep.subr.mxu0 0.0
    %1042 = vmatpush1.msra.mxu0 0.0
    %1043 = vmatprep.subr.mxu0 0.0
    %1044 = vmatpush1.msra.mxu0 0.0
    %1045 = vmatprep.mubr.f32.mxu0 0.0
    %1046 = vmatmul.mubr.f32.gmra.mrb[0].mxu0 %v979
    %v1047 = vpop.f32.mrb[0].mxu0
    %v1048 = vadd.f32 %v975, %v1047
    %v1049 = vpop.f32.mrb[0].mxu0
    %1050 = vdwg.mxu0
    %v1051 = vld [vmem:[%s7] sm:$0x1]
    %v1053 = vlaneseq
    %v1054 = vshrl.u32 %v1053, 7
    %v1055 = vsub.s32 0, %v1054
    %v1056 = vrot.slane %v1051, %v1055
    %v1058 = vadd.f32 %v1048, %v1056
    %v1059 = vld [vmem:[%s8] sm:$0xff]
    %v1060 = vlaneseq
    %v1061 = vand.u32 %v1060, 127
    %vm1062 = vcmp.eq.s32.totalorder %v171, %v1061
    %v1064 = vrot.slane %v1059, 6
    %v1066 = vadd.f32 %v1058, %v1064
    %v1067 = vlaneseq
    %v1068 = vshrl.u32 %v1067, 7
    %v1069 = vsub.s32 0, %v1068
    %v1070 = vrot.slane %v1066, %v1069
    %v1071 = vsel %vm1062, %v1070, 0.0
    %vm1072 = vcmask 64512
    %v1073 = vsel %vm1072, %v1071, 0.0
    %1074 = vadd.xlane.f32.xlu0 %v1073
    %v1075 = vpop.xlane.xlu0 %1074
    %v1076 = vadd.f32 %v1059, %v1075
    %v1077 = vsel %vm1072, %v1076, -inf
    %v1078 = vrot.slane %v1077, 4
    %v1079 = vmax.f32 %v1077, %v1078
    %v1080 = vrot.slane %v1079, 2
    %v1081 = vmax.f32 %v1079, %v1080
    %v1082 = vrot.slane %v1081, 1
    %v1083 = vmax.f32 %v1081, %v1082
    %vm1084 = vcmp.ge.f32.partialorder %v1076, %v1083
    %v1085 = vsel %vm1084, %v171, 8
    %v1086 = vsel %vm1072, %v1085, 2147483647
    %v1087 = vrot.slane %v1086, 4
    %vm1088 = vcmp.lt.s32.totalorder %v1086, %v1087
    %v1089 = vsel %vm1088, %v1086, %v1087
    %v1090 = vrot.slane %v1089, 2
    %vm1091 = vcmp.lt.s32.totalorder %v1089, %v1090
    %v1092 = vsel %vm1091, %v1089, %v1090
    %v1093 = vrot.slane %v1092, 1
    %vm1094 = vcmp.lt.s32.totalorder %v1092, %v1093
    %v1095 = vsel %vm1094, %v1092, %v1093
    %v1096 = vadd.f32 %v1083, %v1058
    %v1097 = vlaneseq
    %v1098 = vshrl.u32 %v1097, 7
    %v1099 = vsub.s32 1, %v1098
    %v1100 = vrot.slane %v1096, %v1099
    %v1101 = vsel %vm1062, %v1100, 0.0
    %v1102 = vsel %vm1072, %v1101, 0.0
    %1103 = vadd.xlane.f32.xlu0 %v1102
    %v1104 = vpop.xlane.xlu0 %1103
    %v1105 = vadd.f32 %v1059, %v1104
    %v1106 = vsel %vm1072, %v1105, -inf
    %v1107 = vrot.slane %v1106, 4
    %v1108 = vmax.f32 %v1106, %v1107
    %v1109 = vrot.slane %v1108, 2
    %v1110 = vmax.f32 %v1108, %v1109
    %v1111 = vrot.slane %v1110, 1
    %v1112 = vmax.f32 %v1110, %v1111
    %vm1113 = vcmp.ge.f32.partialorder %v1105, %v1112
    %v1114 = vsel %vm1113, %v171, 8
    %v1115 = vsel %vm1072, %v1114, 2147483647
    %v1116 = vrot.slane %v1115, 4
    %vm1117 = vcmp.lt.s32.totalorder %v1115, %v1116
    %v1118 = vsel %vm1117, %v1115, %v1116
    %v1119 = vrot.slane %v1118, 2
    %vm1120 = vcmp.lt.s32.totalorder %v1118, %v1119
    %v1121 = vsel %vm1120, %v1118, %v1119
    %v1122 = vrot.slane %v1121, 1
    %vm1123 = vcmp.lt.s32.totalorder %v1121, %v1122
    %v1124 = vsel %vm1123, %v1121, %v1122
    %v1125 = vadd.f32 %v1112, %v1058
    %v1126 = vlaneseq
    %v1127 = vshrl.u32 %v1126, 7
    %v1128 = vsub.s32 2, %v1127
    %v1129 = vrot.slane %v1125, %v1128
    %v1130 = vsel %vm1062, %v1129, 0.0
    %v1131 = vsel %vm1072, %v1130, 0.0
    %1132 = vadd.xlane.f32.xlu0 %v1131
    %v1133 = vpop.xlane.xlu0 %1132
    %v1134 = vadd.f32 %v1059, %v1133
    %v1135 = vsel %vm1072, %v1134, -inf
    %v1136 = vrot.slane %v1135, 4
    %v1137 = vmax.f32 %v1135, %v1136
    %v1138 = vrot.slane %v1137, 2
    %v1139 = vmax.f32 %v1137, %v1138
    %v1140 = vrot.slane %v1139, 1
    %v1141 = vmax.f32 %v1139, %v1140
    %vm1142 = vcmp.ge.f32.partialorder %v1134, %v1141
    %v1143 = vsel %vm1142, %v171, 8
    %v1144 = vsel %vm1072, %v1143, 2147483647
    %v1145 = vrot.slane %v1144, 4
    %vm1146 = vcmp.lt.s32.totalorder %v1144, %v1145
    %v1147 = vsel %vm1146, %v1144, %v1145
    %v1148 = vrot.slane %v1147, 2
    %vm1149 = vcmp.lt.s32.totalorder %v1147, %v1148
    %v1150 = vsel %vm1149, %v1147, %v1148
    %v1151 = vrot.slane %v1150, 1
    %vm1152 = vcmp.lt.s32.totalorder %v1150, %v1151
    %v1153 = vsel %vm1152, %v1150, %v1151
    %v1154 = vadd.f32 %v1141, %v1058
    %v1155 = vlaneseq
    %v1156 = vshrl.u32 %v1155, 7
    %v1157 = vsub.s32 3, %v1156
    %v1158 = vrot.slane %v1154, %v1157
    %v1159 = vsel %vm1062, %v1158, 0.0
    %v1160 = vsel %vm1072, %v1159, 0.0
    %1161 = vadd.xlane.f32.xlu0 %v1160
    %v1162 = vpop.xlane.xlu0 %1161
    %v1163 = vadd.f32 %v1059, %v1162
    %v1164 = vsel %vm1072, %v1163, -inf
    %v1165 = vrot.slane %v1164, 4
    %v1166 = vmax.f32 %v1164, %v1165
    %v1167 = vrot.slane %v1166, 2
    %v1168 = vmax.f32 %v1166, %v1167
    %v1169 = vrot.slane %v1168, 1
    %v1170 = vmax.f32 %v1168, %v1169
    %vm1171 = vcmp.ge.f32.partialorder %v1163, %v1170
    %v1172 = vsel %vm1171, %v171, 8
    %v1173 = vsel %vm1072, %v1172, 2147483647
    %v1174 = vrot.slane %v1173, 4
    %vm1175 = vcmp.lt.s32.totalorder %v1173, %v1174
    %v1176 = vsel %vm1175, %v1173, %v1174
    %v1177 = vrot.slane %v1176, 2
    %vm1178 = vcmp.lt.s32.totalorder %v1176, %v1177
    %v1179 = vsel %vm1178, %v1176, %v1177
    %v1180 = vrot.slane %v1179, 1
    %vm1181 = vcmp.lt.s32.totalorder %v1179, %v1180
    %v1182 = vsel %vm1181, %v1179, %v1180
    %v1183 = vadd.f32 %v1170, %v1058
    %v1184 = vlaneseq
    %v1185 = vshrl.u32 %v1184, 7
    %v1186 = vsub.s32 4, %v1185
    %v1187 = vrot.slane %v1183, %v1186
    %v1188 = vsel %vm1062, %v1187, 0.0
    %v1189 = vsel %vm1072, %v1188, 0.0
    %1190 = vadd.xlane.f32.xlu0 %v1189
    %v1191 = vpop.xlane.xlu0 %1190
    %v1192 = vadd.f32 %v1059, %v1191
    %v1193 = vsel %vm1072, %v1192, -inf
    %v1194 = vrot.slane %v1193, 4
    %v1195 = vmax.f32 %v1193, %v1194
    %v1196 = vrot.slane %v1195, 2
    %v1197 = vmax.f32 %v1195, %v1196
    %v1198 = vrot.slane %v1197, 1
    %v1199 = vmax.f32 %v1197, %v1198
    %vm1200 = vcmp.ge.f32.partialorder %v1192, %v1199
    %v1201 = vsel %vm1200, %v171, 8
    %v1202 = vsel %vm1072, %v1201, 2147483647
    %v1203 = vrot.slane %v1202, 4
    %vm1204 = vcmp.lt.s32.totalorder %v1202, %v1203
    %v1205 = vsel %vm1204, %v1202, %v1203
    %v1206 = vrot.slane %v1205, 2
    %vm1207 = vcmp.lt.s32.totalorder %v1205, %v1206
    %v1208 = vsel %vm1207, %v1205, %v1206
    %v1209 = vrot.slane %v1208, 1
    %vm1210 = vcmp.lt.s32.totalorder %v1208, %v1209
    %v1211 = vsel %vm1210, %v1208, %v1209
    %v1212 = vadd.f32 %v1199, %v1058
    %v1213 = vlaneseq
    %v1214 = vshrl.u32 %v1213, 7
    %v1215 = vsub.s32 5, %v1214
    %v1216 = vrot.slane %v1212, %v1215
    %v1217 = vsel %vm1062, %v1216, 0.0
    %v1218 = vsel %vm1072, %v1217, 0.0
    %1219 = vadd.xlane.f32.xlu0 %v1218
    %v1220 = vpop.xlane.xlu0 %1219
    %v1221 = vadd.f32 %v1059, %v1220
    %v1222 = vsel %vm1072, %v1221, -inf
    %v1223 = vrot.slane %v1222, 4
    %v1224 = vmax.f32 %v1222, %v1223
    %v1225 = vrot.slane %v1224, 2
    %v1226 = vmax.f32 %v1224, %v1225
    %v1227 = vrot.slane %v1226, 1
    %v1228 = vmax.f32 %v1226, %v1227
    %vm1229 = vcmp.ge.f32.partialorder %v1221, %v1228
    %v1230 = vsel %vm1229, %v171, 8
    %v1231 = vsel %vm1072, %v1230, 2147483647
    %v1232 = vrot.slane %v1231, 4
    %vm1233 = vcmp.lt.s32.totalorder %v1231, %v1232
    %v1234 = vsel %vm1233, %v1231, %v1232
    %v1235 = vrot.slane %v1234, 2
    %vm1236 = vcmp.lt.s32.totalorder %v1234, %v1235
    %v1237 = vsel %vm1236, %v1234, %v1235
    %v1238 = vrot.slane %v1237, 1
    %vm1239 = vcmp.lt.s32.totalorder %v1237, %v1238
    %v1240 = vsel %vm1239, %v1237, %v1238
    %v1241 = vadd.f32 %v1228, %v1058
    %v1242 = vlaneseq
    %v1243 = vshrl.u32 %v1242, 7
    %v1244 = vsub.s32 6, %v1243
    %v1245 = vrot.slane %v1241, %v1244
    %v1246 = vsel %vm1062, %v1245, 0.0
    %v1247 = vsel %vm1072, %v1246, 0.0
    %1248 = vadd.xlane.f32.xlu0 %v1247
    %v1249 = vpop.xlane.xlu0 %1248
    %v1250 = vadd.f32 %v1059, %v1249
    %v1251 = vsel %vm1072, %v1250, -inf
    %v1252 = vrot.slane %v1251, 4
    %v1253 = vmax.f32 %v1251, %v1252
    %v1254 = vrot.slane %v1253, 2
    %v1255 = vmax.f32 %v1253, %v1254
    %v1256 = vrot.slane %v1255, 1
    %v1257 = vmax.f32 %v1255, %v1256
    %vm1258 = vcmp.ge.f32.partialorder %v1250, %v1257
    %v1259 = vsel %vm1258, %v171, 8
    %v1260 = vsel %vm1072, %v1259, 2147483647
    %v1261 = vrot.slane %v1260, 4
    %vm1262 = vcmp.lt.s32.totalorder %v1260, %v1261
    %v1263 = vsel %vm1262, %v1260, %v1261
    %v1264 = vrot.slane %v1263, 2
    %vm1265 = vcmp.lt.s32.totalorder %v1263, %v1264
    %v1266 = vsel %vm1265, %v1263, %v1264
    %v1267 = vrot.slane %v1266, 1
    %vm1268 = vcmp.lt.s32.totalorder %v1266, %v1267
    %v1269 = vsel %vm1268, %v1266, %v1267
    %v1270 = vadd.f32 %v1257, %v1058
    %v1271 = vlaneseq
    %v1272 = vshrl.u32 %v1271, 7
    %v1273 = vsub.s32 7, %v1272
    %v1274 = vrot.slane %v1270, %v1273
    %v1275 = vsel %vm1062, %v1274, 0.0
    %v1276 = vsel %vm1072, %v1275, 0.0
    %1277 = vadd.xlane.f32.xlu0 %v1276
    %v1278 = vpop.xlane.xlu0 %1277
    %v1279 = vadd.f32 %v1278, %v1059
    %vm1280 = vcmask 64568
    %v1281 = vsel %vm1280, %v1279, -inf
    %v1282 = vrot.slane %v1281, 4
    %v1283 = vmax.f32 %v1281, %v1282
    %v1284 = vrot.slane %v1283, 2
    %v1285 = vmax.f32 %v1283, %v1284
    %v1286 = vrot.slane %v1285, 1
    %v1287 = vmax.f32 %v1285, %v1286
    %vm1288 = vcmp.ge.f32.partialorder %v1279, %v1287
    %v1289 = vsel %vm1288, %v171, 8
    %v1290 = vsel %vm1280, %v1289, 2147483647
    %v1291 = vrot.slane %v1290, 4
    %vm1292 = vcmp.lt.s32.totalorder %v1290, %v1291
    %v1293 = vsel %vm1292, %v1290, %v1291
    %v1294 = vrot.slane %v1293, 2
    %vm1295 = vcmp.lt.s32.totalorder %v1293, %v1294
    %v1296 = vsel %vm1295, %v1293, %v1294
    %v1297 = vrot.slane %v1296, 1
    %vm1298 = vcmp.lt.s32.totalorder %v1296, %v1297
    %v1299 = vsel %vm1298, %v1296, %v1297
    %vm1300 = vcmp.eq.s32.totalorder %v1061, 7
    %1301 = vset.pattern.permute.xlu0 7
    %1302 = vperm.xlu0 %1301, %v1299
    %v1303 = vpop.permute.xlu0 %1302
    %v1304 = vsel %vm1300, %v1303, 0
    %vm1305 = vcmp.eq.s32.totalorder %v1061, %v1303
    %v1306 = vsel %vm1305, %v1269, 0
    %v1307 = vsel %vm1072, %v1306, 0
    %v1308 = vand.u32 %v1307, 65535
    %v1309 = vshrl.u32 %v1307, 16
    %v1310 = vcvt.s32.f32 %v1308
    %v1311 = vcvt.s32.f32 %v1309
    %1312 = vadd.xlane.f32.xlu0 %v1310
    %v1313 = vpop.xlane.xlu0 %1312
    %1314 = vadd.xlane.f32.xlu0 %v1311
    %v1315 = vpop.xlane.xlu0 %1314
    %v1316 = vcvt.f32.s32 %v1313
    %v1317 = vcvt.f32.s32 %v1315
    %v1318 = vshll.u32 %v1317, 16
    %v1319 = vadd.s32 %v1318, %v1316
    %vm1320 = vcmp.eq.s32.totalorder %v1061, 6
    %v1321 = vsel %vm1320, %v1319, 0
    %v1322 = vadd.s32 %v1304, %v1321
    %vm1323 = vcmp.eq.s32.totalorder %v1061, %v1319
    %v1324 = vsel %vm1323, %v1240, 0
    %v1325 = vsel %vm1072, %v1324, 0
    %v1326 = vand.u32 %v1325, 65535
    %v1327 = vshrl.u32 %v1325, 16
    %v1328 = vcvt.s32.f32 %v1326
    %v1329 = vcvt.s32.f32 %v1327
    %1330 = vadd.xlane.f32.xlu0 %v1328
    %v1331 = vpop.xlane.xlu0 %1330
    %1332 = vadd.xlane.f32.xlu0 %v1329
    %v1333 = vpop.xlane.xlu0 %1332
    %v1334 = vcvt.f32.s32 %v1331
    %v1335 = vcvt.f32.s32 %v1333
    %v1336 = vshll.u32 %v1335, 16
    %v1337 = vadd.s32 %v1336, %v1334
    %vm1338 = vcmp.eq.s32.totalorder %v1061, 5
    %v1339 = vsel %vm1338, %v1337, 0
    %v1340 = vadd.s32 %v1322, %v1339
    %vm1341 = vcmp.eq.s32.totalorder %v1061, %v1337
    %v1342 = vsel %vm1341, %v1211, 0
    %v1343 = vsel %vm1072, %v1342, 0
    %v1344 = vand.u32 %v1343, 65535
    %v1345 = vshrl.u32 %v1343, 16
    %v1346 = vcvt.s32.f32 %v1344
    %v1347 = vcvt.s32.f32 %v1345
    %1348 = vadd.xlane.f32.xlu0 %v1346
    %v1349 = vpop.xlane.xlu0 %1348
    %1350 = vadd.xlane.f32.xlu0 %v1347
    %v1351 = vpop.xlane.xlu0 %1350
    %v1352 = vcvt.f32.s32 %v1349
    %v1353 = vcvt.f32.s32 %v1351
    %v1354 = vshll.u32 %v1353, 16
    %v1355 = vadd.s32 %v1354, %v1352
    %vm1356 = vcmp.eq.s32.totalorder %v1061, 4
    %v1357 = vsel %vm1356, %v1355, 0
    %v1358 = vadd.s32 %v1340, %v1357
    %vm1359 = vcmp.eq.s32.totalorder %v1061, %v1355
    %v1360 = vsel %vm1359, %v1182, 0
    %v1361 = vsel %vm1072, %v1360, 0
    %v1362 = vand.u32 %v1361, 65535
    %v1363 = vshrl.u32 %v1361, 16
    %v1364 = vcvt.s32.f32 %v1362
    %v1365 = vcvt.s32.f32 %v1363
    %1366 = vadd.xlane.f32.xlu0 %v1364
    %v1367 = vpop.xlane.xlu0 %1366
    %1368 = vadd.xlane.f32.xlu0 %v1365
    %v1369 = vpop.xlane.xlu0 %1368
    %v1370 = vcvt.f32.s32 %v1367
    %v1371 = vcvt.f32.s32 %v1369
    %v1372 = vshll.u32 %v1371, 16
    %v1373 = vadd.s32 %v1372, %v1370
    %vm1374 = vcmp.eq.s32.totalorder %v1061, 3
    %v1375 = vsel %vm1374, %v1373, 0
    %v1376 = vadd.s32 %v1358, %v1375
    %vm1377 = vcmp.eq.s32.totalorder %v1061, %v1373
    %v1378 = vsel %vm1377, %v1153, 0
    %v1379 = vsel %vm1072, %v1378, 0
    %v1380 = vand.u32 %v1379, 65535
    %v1381 = vshrl.u32 %v1379, 16
    %v1382 = vcvt.s32.f32 %v1380
    %v1383 = vcvt.s32.f32 %v1381
    %1384 = vadd.xlane.f32.xlu0 %v1382
    %v1385 = vpop.xlane.xlu0 %1384
    %1386 = vadd.xlane.f32.xlu0 %v1383
    %v1387 = vpop.xlane.xlu0 %1386
    %v1388 = vcvt.f32.s32 %v1385
    %v1389 = vcvt.f32.s32 %v1387
    %v1390 = vshll.u32 %v1389, 16
    %v1391 = vadd.s32 %v1390, %v1388
    %vm1392 = vcmp.eq.s32.totalorder %v1061, 2
    %v1393 = vsel %vm1392, %v1391, 0
    %v1394 = vadd.s32 %v1376, %v1393
    %vm1395 = vcmp.eq.s32.totalorder %v1061, %v1391
    %v1396 = vsel %vm1395, %v1124, 0
    %v1397 = vsel %vm1072, %v1396, 0
    %v1398 = vand.u32 %v1397, 65535
    %v1399 = vshrl.u32 %v1397, 16
    %v1400 = vcvt.s32.f32 %v1398
    %v1401 = vcvt.s32.f32 %v1399
    %1402 = vadd.xlane.f32.xlu0 %v1400
    %v1403 = vpop.xlane.xlu0 %1402
    %1404 = vadd.xlane.f32.xlu0 %v1401
    %v1405 = vpop.xlane.xlu0 %1404
    %v1406 = vcvt.f32.s32 %v1403
    %v1407 = vcvt.f32.s32 %v1405
    %v1408 = vshll.u32 %v1407, 16
    %v1409 = vadd.s32 %v1408, %v1406
    %vm1410 = vcmp.eq.s32.totalorder %v1061, 1
    %v1411 = vsel %vm1410, %v1409, 0
    %v1412 = vadd.s32 %v1394, %v1411
    %vm1413 = vcmp.eq.s32.totalorder %v1061, %v1409
    %v1414 = vsel %vm1413, %v1095, 0
    %v1415 = vsel %vm1072, %v1414, 0
    %v1416 = vand.u32 %v1415, 65535
    %v1417 = vshrl.u32 %v1415, 16
    %v1418 = vcvt.s32.f32 %v1416
    %v1419 = vcvt.s32.f32 %v1417
    %1420 = vadd.xlane.f32.xlu0 %v1418
    %v1421 = vpop.xlane.xlu0 %1420
    %1422 = vadd.xlane.f32.xlu0 %v1419
    %v1423 = vpop.xlane.xlu0 %1422
    %v1424 = vcvt.f32.s32 %v1421
    %v1425 = vcvt.f32.s32 %v1423
    %v1426 = vshll.u32 %v1425, 16
    %v1427 = vadd.s32 %v1426, %v1424
    %vm1428 = vcmp.eq.s32.totalorder %v1061, 0
    %v1429 = vsel %vm1428, %v1427, 0
    %v1430 = vadd.s32 %v1412, %v1429
    %1432 = vrot.lane.b32.xlu0 %v1287, 121
    %v1433 = vpop.permute.xlu0 %1432
    %vm1435 = vcmask 0
    %1436 = vst.msk [vmem:[#allocation8] sm:$0x1] %vm1435, %v1433
    %vm1437 = vcmask 57344
    %1438 = vst.msk [vmem:[#allocation9] sm:$0x1] %vm1437, %v1430
    // Predicated region
    $region42: #{lstm_tagger_forward.1} parent=1 // pred_check
      _
    $region43: #{lstm_tagger_forward.1} parent=1 // pred_check_branch
      %1440 = sbr.rel (0) target = $region45
    $region44: #{lstm_tagger_forward.1} parent=1 // pred_region
      %s1442 = ssub.s32 16, 16
      %1443 = vsyncadd [#allocation6], %s1442
      %s1445 = sshll.u32 [#allocation8], 4
      %s1446 = int_to_ptr.vmem [resolvable:$true] %s1445
      %1448 = dma.vmem_to_hbm [thread:$0]  %s1446, 16, %s9, [#allocation6]
    $region45: #{lstm_tagger_forward.1} parent=1 // pred_fallthru
      _
    // Predicated region
    $region46: #{lstm_tagger_forward.1} parent=1 // pred_check
      _
    $region47: #{lstm_tagger_forward.1} parent=1 // pred_check_branch
      %1450 = sbr.rel (0) target = $region49
    $region48: #{lstm_tagger_forward.1} parent=1 // pred_region
      %s1452 = ssub.s32 16, 16
      %1453 = vsyncadd [#allocation10], %s1452
      %s1455 = sshll.u32 [#allocation9], 4
      %s1456 = int_to_ptr.vmem [resolvable:$true] %s1455
      %1458 = dma.vmem_to_hbm [thread:$0]  %s1456, 16, %s10, [#allocation10]
    $region49: #{lstm_tagger_forward.1} parent=1 // pred_fallthru
      _
    // Predicated region
    $region50: #{lstm_tagger_forward.1} parent=1 // pred_check
      _
    $region51: #{lstm_tagger_forward.1} parent=1 // pred_check_branch
      %1460 = sbr.rel (0) target = $region53
    $region52: #{lstm_tagger_forward.1} parent=1 // pred_region
      %1461 = dma.done [#allocation6], 16
    $region53: #{lstm_tagger_forward.1} parent=1 // pred_fallthru
      _
    // Predicated region
    $region54: #{lstm_tagger_forward.1} parent=1 // pred_check
      _
    $region55: #{lstm_tagger_forward.1} parent=1 // pred_check_branch
      %1463 = sbr.rel (0) target = $region57
    $region56: #{lstm_tagger_forward.1} parent=1 // pred_region
      %1464 = dma.done [#allocation10], 16
    $region57: #{lstm_tagger_forward.1} parent=1 // pred_fallthru
      _
    %1465 = vsyncpa [#allocation6], 1
    %1466 = vsyncpa [#allocation10], 1
    %1467 = vsyncpa [#allocation7], 1

</llo_original>
